<compile_context>
chip_gen: v7x
topology: tpu7x:2x2x1
jax: 0.10.0
libtpu: 0.0.40
codegen_flags: <defaults>
</compile_context>

<pallas_src>
import math
from functools import partial

import jax
import jax.numpy as jnp
from jax.experimental import pallas as pl
from jax.experimental.pallas import tpu as pltpu


# ----------------------------- Pallas kernel ------------------------------- #
def mha_kernel(x_ref, wqkv_ref, bqkv_ref, wo_ref, bo_ref, out_ref,
               qkv_scr, val_scr, *, block_b, seq_len, num_heads, dim_k,
               dim_model):
    # x_ref    : (Bt*S, D_in)   bf16   current block of batch elements (rows)
    # wqkv_ref : (D_in, 3*dm)   bf16   fused QKV weights (scale folded into Q)
    # bqkv_ref : (1, 3*dm)      f32
    # wo_ref   : (dm, dm)       bf16   output projection (already transposed)
    # bo_ref   : (1, dm)        f32
    # out_ref  : (Bt*S, dm)     f32
    # qkv_scr  : (3, Bt*H, S, dk) bf16 VMEM scratch (per-head q/k/v)
    # val_scr  : (Bt*S, dm)       bf16 VMEM scratch (reassembled values)
    Bt, S, H, dk, dm = block_b, seq_len, num_heads, dim_k, dim_model

    # ---- fused QKV projection: one lane-dense GEMM ------------------------
    x = x_ref[...]                                            # (Bt*S, D_in) bf16
    qkv = jnp.dot(x, wqkv_ref[...], preferred_element_type=jnp.float32)
    qkv = (qkv + bqkv_ref[...]).astype(jnp.bfloat16)          # (Bt*S, 3*dm)

    # ---- relayout to (3, Bt*H, S, dk) via static slices into VMEM scratch --
    for c in range(3):                                        # q / k / v
        for b in range(Bt):
            for h in range(H):
                qkv_scr[c, b * H + h] = qkv[
                    b * S:(b + 1) * S,
                    c * dm + h * dk: c * dm + (h + 1) * dk]

    qh = qkv_scr[0]                                           # (G, S, dk) bf16
    kh = qkv_scr[1]
    vh = qkv_scr[2]

    # ---- attention, batched over G = Bt*H (1/sqrt(dk) already in W_q) ------
    s = jnp.einsum('gqd,gkd->gqk', qh, kh,
                   preferred_element_type=jnp.float32)        # (G, S, S) f32
    m = jnp.max(s, axis=-1, keepdims=True)
    p = jnp.exp(s - m)
    l = jnp.sum(p, axis=-1, keepdims=True)
    attn = p * pl.reciprocal(l, approx=True)
    o = jnp.einsum('gqk,gkd->gqd', attn.astype(jnp.bfloat16), vh,
                   preferred_element_type=jnp.float32)        # (G, S, dk) f32

    # ---- reassemble per-head values into (Bt*S, dm) (permute+view) ---------
    for b in range(Bt):
        for h in range(H):
            val_scr[b * S:(b + 1) * S, h * dk:(h + 1) * dk] = (
                o[b * H + h].astype(jnp.bfloat16))

    # ---- fused output projection + head-sum: single GEMM with K = dm -------
    out = jnp.dot(val_scr[...], wo_ref[...],
                  preferred_element_type=jnp.float32)
    out_ref[...] = (out + bo_ref[...]).astype(out_ref.dtype)


# ------------------------------ helpers ------------------------------------ #
def _pick_block_b(B, S, target_rows=256):
    """Largest divisor of B whose row-block (Bt*S) is legal and ~target_rows."""
    divisors = [d for d in range(1, B + 1) if B % d == 0]
    valid = [d for d in divisors if d == B or (d * S) % 8 == 0]
    fitting = [d for d in valid if d * S <= target_rows]
    return max(fitting) if fitting else min(valid)


# ------------------------------ wrapper ------------------------------------ #
@partial(jax.jit, static_argnames=("num_heads", "dim_model"))
def multihead_attention(x, w_qkv, b_qkv, w_o, b_o, *, num_heads, dim_model):
    """x: (B, S, D_in). PyTorch Linear layouts: w_qkv (3*dm, D_in),
    b_qkv (3*dm,), w_o (dm, dm), b_o (dm,)."""
    B, S, D_in = x.shape
    H = num_heads
    dm = dim_model
    assert dm % H == 0, "dim_model must be divisible by num_heads"
    dk = dm // H

    Bt = _pick_block_b(B, S)
    G = Bt * H

    # Host-side one-time re-layout; fold 1/sqrt(dk) into the Q columns.
    scale = 1.0 / math.sqrt(dk)
    col_scale = jnp.concatenate(
        [jnp.full((dm,), scale, jnp.float32), jnp.ones((2 * dm,), jnp.float32)])
    wqkv = (w_qkv.T * col_scale[None, :]).astype(jnp.bfloat16)   # (D_in, 3*dm)
    bqkv = (b_qkv * col_scale).reshape(1, 3 * dm).astype(jnp.float32)
    wo = w_o.T.astype(jnp.bfloat16)                              # (dm, dm)
    bo = b_o.reshape(1, dm).astype(jnp.float32)

    # bf16 activations into the kernel (halves x DMA bytes).
    x2 = x.reshape(B * S, D_in).astype(jnp.bfloat16)

    # Advisory cost estimate for XLA scheduling around the custom call.
    flops = (2 * B * S * D_in * 3 * dm          # fused QKV GEMM
             + 4 * B * H * S * S * dk           # QK^T + PV
             + 2 * B * S * dm * dm)             # output projection
    transcendentals = B * H * S * S             # exp in softmax
    bytes_accessed = (B * S * D_in * 2 + B * S * dm * 4
                      + (D_in * 3 * dm + dm * dm) * 2 + (3 * dm + dm) * 4)

    # Rough VMEM budget (double-buffered I/O blocks + weights + scratch +
    # live intermediates); clamp into [32 MiB, 64 MiB] so it fits v7x.
    vmem_est = (2 * (Bt * S * D_in * 2) + 2 * (Bt * S * dm * 4)
                + 2 * ((D_in * 3 * dm + dm * dm) * 2 + (3 * dm + dm) * 4)
                + 3 * G * S * dk * 2 + Bt * S * dm * 2
                + Bt * S * 3 * dm * 4 + 3 * G * S * S * 4 + G * S * dk * 4)
    vmem_limit = int(min(max(2 * vmem_est, 32 * 1024 * 1024), 64 * 1024 * 1024))

    kernel = partial(mha_kernel, block_b=Bt, seq_len=S, num_heads=H,
                     dim_k=dk, dim_model=dm)

    out2 = pl.pallas_call(
        kernel,
        out_shape=jax.ShapeDtypeStruct((B * S, dm), jnp.float32),
        grid_spec=pltpu.PrefetchScalarGridSpec(
            num_scalar_prefetch=0,
            grid=(B // Bt,),
            in_specs=[
                pl.BlockSpec((Bt * S, D_in), lambda i: (i, 0)),
                pl.BlockSpec((D_in, 3 * dm), lambda i: (0, 0)),
                pl.BlockSpec((1, 3 * dm), lambda i: (0, 0)),
                pl.BlockSpec((dm, dm), lambda i: (0, 0)),
                pl.BlockSpec((1, dm), lambda i: (0, 0)),
            ],
            out_specs=pl.BlockSpec((Bt * S, dm), lambda i: (i, 0)),
            scratch_shapes=[
                pltpu.VMEM((3, G, S, dk), jnp.bfloat16),
                pltpu.VMEM((Bt * S, dm), jnp.bfloat16),
            ],
        ),
        compiler_params=pltpu.CompilerParams(
            dimension_semantics=("parallel",),
            vmem_limit_bytes=vmem_limit),
        cost_estimate=pl.CostEstimate(flops=flops,
                                      transcendentals=transcendentals,
                                      bytes_accessed=bytes_accessed),
    )(x2, wqkv, bqkv, wo, bo)

    return out2.reshape(B, S, dm)


# --------------------------- reference (pure JAX) --------------------------- #
def reference_mha(x, w_qkv, b_qkv, w_o, b_o, *, num_heads, dim_model):
    B, S, _ = x.shape
    dk = dim_model // num_heads
    qkv = jnp.einsum('bsd,od->bso', x, w_qkv) + b_qkv
    q, k, v = jnp.split(qkv, 3, axis=-1)

    def rs(t):
        return t.reshape(B, S, num_heads, dk).transpose(0, 2, 1, 3)

    q, k, v = rs(q), rs(k), rs(v)
    s = jnp.einsum('bhqd,bhkd->bhqk', q, k) / math.sqrt(dk)
    attn = jax.nn.softmax(s, axis=-1)
    vals = jnp.einsum('bhqk,bhkd->bhqd', attn, v)
    vals = vals.transpose(0, 2, 1, 3).reshape(B, S, dim_model)
    return jnp.einsum('bsd,od->bso', vals, w_o) + b_o


# ----------------------------- param init ---------------------------------- #
def xavier_uniform(key, shape):
    fan_out, fan_in = shape
    limit = math.sqrt(6.0 / (fan_in + fan_out))
    return jax.random.uniform(key, shape, jnp.float32, -limit, limit)


if __name__ == "__main__":
    batch_size = 2
    seq_length = 8
    input_dim = 32
    num_heads = 4
    dim_model = 32

    key = jax.random.PRNGKey(0)
    k_x, k_qkv, k_o = jax.random.split(key, 3)

    x = jax.random.normal(k_x, (batch_size, seq_length, input_dim), jnp.float32)

    # PyTorch nn.Linear layout: weight (out_features, in_features), bias (out,)
    # xavier_uniform weights, zero biases — matching _reset_parameters().
    w_qkv = xavier_uniform(k_qkv, (3 * dim_model, input_dim))
    b_qkv = jnp.zeros((3 * dim_model,), jnp.float32)
    w_o = xavier_uniform(k_o, (dim_model, dim_model))
    b_o = jnp.zeros((dim_model,), jnp.float32)

    out = multihead_attention(x, w_qkv, b_qkv, w_o, b_o,
                              num_heads=num_heads, dim_model=dim_model)
    out = jax.block_until_ready(out)

    ref = reference_mha(x, w_qkv, b_qkv, w_o, b_o,
                        num_heads=num_heads, dim_model=dim_model)
    assert out.shape == (batch_size, seq_length, dim_model)
    # bf16 MXU operands (f32 accumulation) + approximate reciprocal => loose tol.
    assert jnp.allclose(out, ref, atol=2.5e-2, rtol=2.5e-2), "mismatch vs reference"

    print("KERNEL_OK")
</pallas_src>

<mosaic_0001>
module attributes {stable_mosaic.version = 11 : i64} {
  func.func @mha_kernel(%arg0: i32, %arg1: memref<16x32xbf16, #tpu.memory_space<vmem>>, %arg2: memref<32x96xbf16, #tpu.memory_space<vmem>>, %arg3: memref<1x96xf32, #tpu.memory_space<vmem>>, %arg4: memref<32x32xbf16, #tpu.memory_space<vmem>>, %arg5: memref<1x32xf32, #tpu.memory_space<vmem>>, %arg6: memref<16x32xf32, #tpu.memory_space<vmem>>, %arg7: memref<3x8x8x8xbf16, #tpu.memory_space<vmem>>, %arg8: memref<16x32xbf16, #tpu.memory_space<vmem>>) attributes {dimension_semantics = [#tpu.dimension_semantics<parallel>], iteration_bounds = array<i64: 1>, scalar_prefetch = 0 : i64, scratch_operands = 2 : i64, tpu.core_type = #tpu.core_type<tc>, window_params = [{transform_indices = @transform_0, window_bounds = array<i64: 16, 32>}, {pipeline_mode = #tpu.pipeline_mode<synchronous>, transform_indices = @transform_1, window_bounds = array<i64: 32, 96>}, {pipeline_mode = #tpu.pipeline_mode<synchronous>, transform_indices = @transform_2, window_bounds = array<i64: 1, 96>}, {pipeline_mode = #tpu.pipeline_mode<synchronous>, transform_indices = @transform_3, window_bounds = array<i64: 32, 32>}, {pipeline_mode = #tpu.pipeline_mode<synchronous>, transform_indices = @transform_4, window_bounds = array<i64: 1, 32>}, {transform_indices = @transform_5, window_bounds = array<i64: 16, 32>}]} {
    %c0 = arith.constant 0 : index
    %c0_0 = arith.constant 0 : index
    %0 = vector.load %arg1[%c0, %c0_0] : memref<16x32xbf16, #tpu.memory_space<vmem>>, vector<16x32xbf16>
    %c0_1 = arith.constant 0 : index
    %c0_2 = arith.constant 0 : index
    %1 = vector.load %arg2[%c0_1, %c0_2] : memref<32x96xbf16, #tpu.memory_space<vmem>>, vector<32x96xbf16>
    %cst = arith.constant dense<0.000000e+00> : vector<16x96xf32>
    %2 = tpu.matmul %0, %1, %cst {dimension_numbers = #tpu.dot_dimension_numbers<[1], [0], [0], [1], [0, 0, 1, 1], [], []>} : vector<16x32xbf16>, vector<32x96xbf16>, vector<16x96xf32> -> vector<16x96xf32>
    %c0_3 = arith.constant 0 : index
    %c0_4 = arith.constant 0 : index
    %3 = vector.load %arg3[%c0_3, %c0_4] : memref<1x96xf32, #tpu.memory_space<vmem>>, vector<1x96xf32>
    %4 = vector.broadcast %3 : vector<1x96xf32> to vector<16x96xf32>
    %5 = arith.addf %2, %4 : vector<16x96xf32>
    %6 = arith.truncf %5 : vector<16x96xf32> to vector<16x96xbf16>
    %7 = vector.extract_strided_slice %6 {offsets = [0, 0], sizes = [8, 8], strides = [1, 1]} : vector<16x96xbf16> to vector<8x8xbf16>
    %c0_5 = arith.constant 0 : index
    %c0_6 = arith.constant 0 : index
    %c0_7 = arith.constant 0 : index
    %c0_8 = arith.constant 0 : index
    %8 = vector.load %arg7[%c0_5, %c0_6, %c0_7, %c0_8] : memref<3x8x8x8xbf16, #tpu.memory_space<vmem>>, vector<1x1x8x8xbf16>
    %9 = vector.shape_cast %8 : vector<1x1x8x8xbf16> to vector<8x8xbf16>
    %10 = vector.shape_cast %7 : vector<8x8xbf16> to vector<1x1x8x8xbf16>
    tpu.vector_store %arg7[%c0_5, %c0_6, %c0_7, %c0_8], %10 {strides = array<i32>} : memref<3x8x8x8xbf16, #tpu.memory_space<vmem>>, vector<1x1x8x8xbf16>,
    %11 = vector.extract_strided_slice %6 {offsets = [0, 8], sizes = [8, 8], strides = [1, 1]} : vector<16x96xbf16> to vector<8x8xbf16>
    %c0_9 = arith.constant 0 : index
    %c1 = arith.constant 1 : index
    %c0_10 = arith.constant 0 : index
    %c0_11 = arith.constant 0 : index
    %12 = vector.load %arg7[%c0_9, %c1, %c0_10, %c0_11] : memref<3x8x8x8xbf16, #tpu.memory_space<vmem>>, vector<1x1x8x8xbf16>
    %13 = vector.shape_cast %12 : vector<1x1x8x8xbf16> to vector<8x8xbf16>
    %14 = vector.shape_cast %11 : vector<8x8xbf16> to vector<1x1x8x8xbf16>
    tpu.vector_store %arg7[%c0_9, %c1, %c0_10, %c0_11], %14 {strides = array<i32>} : memref<3x8x8x8xbf16, #tpu.memory_space<vmem>>, vector<1x1x8x8xbf16>,
    %15 = vector.extract_strided_slice %6 {offsets = [0, 16], sizes = [8, 8], strides = [1, 1]} : vector<16x96xbf16> to vector<8x8xbf16>
    %c0_12 = arith.constant 0 : index
    %c2 = arith.constant 2 : index
    %c0_13 = arith.constant 0 : index
    %c0_14 = arith.constant 0 : index
    %16 = vector.load %arg7[%c0_12, %c2, %c0_13, %c0_14] : memref<3x8x8x8xbf16, #tpu.memory_space<vmem>>, vector<1x1x8x8xbf16>
    %17 = vector.shape_cast %16 : vector<1x1x8x8xbf16> to vector<8x8xbf16>
    %18 = vector.shape_cast %15 : vector<8x8xbf16> to vector<1x1x8x8xbf16>
    tpu.vector_store %arg7[%c0_12, %c2, %c0_13, %c0_14], %18 {strides = array<i32>} : memref<3x8x8x8xbf16, #tpu.memory_space<vmem>>, vector<1x1x8x8xbf16>,
    %19 = vector.extract_strided_slice %6 {offsets = [0, 24], sizes = [8, 8], strides = [1, 1]} : vector<16x96xbf16> to vector<8x8xbf16>
    %c0_15 = arith.constant 0 : index
    %c3 = arith.constant 3 : index
    %c0_16 = arith.constant 0 : index
    %c0_17 = arith.constant 0 : index
    %20 = vector.load %arg7[%c0_15, %c3, %c0_16, %c0_17] : memref<3x8x8x8xbf16, #tpu.memory_space<vmem>>, vector<1x1x8x8xbf16>
    %21 = vector.shape_cast %20 : vector<1x1x8x8xbf16> to vector<8x8xbf16>
    %22 = vector.shape_cast %19 : vector<8x8xbf16> to vector<1x1x8x8xbf16>
    tpu.vector_store %arg7[%c0_15, %c3, %c0_16, %c0_17], %22 {strides = array<i32>} : memref<3x8x8x8xbf16, #tpu.memory_space<vmem>>, vector<1x1x8x8xbf16>,
    %23 = vector.extract_strided_slice %6 {offsets = [8, 0], sizes = [8, 8], strides = [1, 1]} : vector<16x96xbf16> to vector<8x8xbf16>
    %c0_18 = arith.constant 0 : index
    %c4 = arith.constant 4 : index
    %c0_19 = arith.constant 0 : index
    %c0_20 = arith.constant 0 : index
    %24 = vector.load %arg7[%c0_18, %c4, %c0_19, %c0_20] : memref<3x8x8x8xbf16, #tpu.memory_space<vmem>>, vector<1x1x8x8xbf16>
    %25 = vector.shape_cast %24 : vector<1x1x8x8xbf16> to vector<8x8xbf16>
    %26 = vector.shape_cast %23 : vector<8x8xbf16> to vector<1x1x8x8xbf16>
    tpu.vector_store %arg7[%c0_18, %c4, %c0_19, %c0_20], %26 {strides = array<i32>} : memref<3x8x8x8xbf16, #tpu.memory_space<vmem>>, vector<1x1x8x8xbf16>,
    %27 = vector.extract_strided_slice %6 {offsets = [8, 8], sizes = [8, 8], strides = [1, 1]} : vector<16x96xbf16> to vector<8x8xbf16>
    %c0_21 = arith.constant 0 : index
    %c5 = arith.constant 5 : index
    %c0_22 = arith.constant 0 : index
    %c0_23 = arith.constant 0 : index
    %28 = vector.load %arg7[%c0_21, %c5, %c0_22, %c0_23] : memref<3x8x8x8xbf16, #tpu.memory_space<vmem>>, vector<1x1x8x8xbf16>
    %29 = vector.shape_cast %28 : vector<1x1x8x8xbf16> to vector<8x8xbf16>
    %30 = vector.shape_cast %27 : vector<8x8xbf16> to vector<1x1x8x8xbf16>
    tpu.vector_store %arg7[%c0_21, %c5, %c0_22, %c0_23], %30 {strides = array<i32>} : memref<3x8x8x8xbf16, #tpu.memory_space<vmem>>, vector<1x1x8x8xbf16>,
    %31 = vector.extract_strided_slice %6 {offsets = [8, 16], sizes = [8, 8], strides = [1, 1]} : vector<16x96xbf16> to vector<8x8xbf16>
    %c0_24 = arith.constant 0 : index
    %c6 = arith.constant 6 : index
    %c0_25 = arith.constant 0 : index
    %c0_26 = arith.constant 0 : index
    %32 = vector.load %arg7[%c0_24, %c6, %c0_25, %c0_26] : memref<3x8x8x8xbf16, #tpu.memory_space<vmem>>, vector<1x1x8x8xbf16>
    %33 = vector.shape_cast %32 : vector<1x1x8x8xbf16> to vector<8x8xbf16>
    %34 = vector.shape_cast %31 : vector<8x8xbf16> to vector<1x1x8x8xbf16>
    tpu.vector_store %arg7[%c0_24, %c6, %c0_25, %c0_26], %34 {strides = array<i32>} : memref<3x8x8x8xbf16, #tpu.memory_space<vmem>>, vector<1x1x8x8xbf16>,
    %35 = vector.extract_strided_slice %6 {offsets = [8, 24], sizes = [8, 8], strides = [1, 1]} : vector<16x96xbf16> to vector<8x8xbf16>
    %c0_27 = arith.constant 0 : index
    %c7 = arith.constant 7 : index
    %c0_28 = arith.constant 0 : index
    %c0_29 = arith.constant 0 : index
    %36 = vector.load %arg7[%c0_27, %c7, %c0_28, %c0_29] : memref<3x8x8x8xbf16, #tpu.memory_space<vmem>>, vector<1x1x8x8xbf16>
    %37 = vector.shape_cast %36 : vector<1x1x8x8xbf16> to vector<8x8xbf16>
    %38 = vector.shape_cast %35 : vector<8x8xbf16> to vector<1x1x8x8xbf16>
    tpu.vector_store %arg7[%c0_27, %c7, %c0_28, %c0_29], %38 {strides = array<i32>} : memref<3x8x8x8xbf16, #tpu.memory_space<vmem>>, vector<1x1x8x8xbf16>,
    %39 = vector.extract_strided_slice %6 {offsets = [0, 32], sizes = [8, 8], strides = [1, 1]} : vector<16x96xbf16> to vector<8x8xbf16>
    %c1_30 = arith.constant 1 : index
    %c0_31 = arith.constant 0 : index
    %c0_32 = arith.constant 0 : index
    %c0_33 = arith.constant 0 : index
    %40 = vector.load %arg7[%c1_30, %c0_31, %c0_32, %c0_33] : memref<3x8x8x8xbf16, #tpu.memory_space<vmem>>, vector<1x1x8x8xbf16>
    %41 = vector.shape_cast %40 : vector<1x1x8x8xbf16> to vector<8x8xbf16>
    %42 = vector.shape_cast %39 : vector<8x8xbf16> to vector<1x1x8x8xbf16>
    tpu.vector_store %arg7[%c1_30, %c0_31, %c0_32, %c0_33], %42 {strides = array<i32>} : memref<3x8x8x8xbf16, #tpu.memory_space<vmem>>, vector<1x1x8x8xbf16>,
    %43 = vector.extract_strided_slice %6 {offsets = [0, 40], sizes = [8, 8], strides = [1, 1]} : vector<16x96xbf16> to vector<8x8xbf16>
    %c1_34 = arith.constant 1 : index
    %c1_35 = arith.constant 1 : index
    %c0_36 = arith.constant 0 : index
    %c0_37 = arith.constant 0 : index
    %44 = vector.load %arg7[%c1_34, %c1_35, %c0_36, %c0_37] : memref<3x8x8x8xbf16, #tpu.memory_space<vmem>>, vector<1x1x8x8xbf16>
    %45 = vector.shape_cast %44 : vector<1x1x8x8xbf16> to vector<8x8xbf16>
    %46 = vector.shape_cast %43 : vector<8x8xbf16> to vector<1x1x8x8xbf16>
    tpu.vector_store %arg7[%c1_34, %c1_35, %c0_36, %c0_37], %46 {strides = array<i32>} : memref<3x8x8x8xbf16, #tpu.memory_space<vmem>>, vector<1x1x8x8xbf16>,
    %47 = vector.extract_strided_slice %6 {offsets = [0, 48], sizes = [8, 8], strides = [1, 1]} : vector<16x96xbf16> to vector<8x8xbf16>
    %c1_38 = arith.constant 1 : index
    %c2_39 = arith.constant 2 : index
    %c0_40 = arith.constant 0 : index
    %c0_41 = arith.constant 0 : index
    %48 = vector.load %arg7[%c1_38, %c2_39, %c0_40, %c0_41] : memref<3x8x8x8xbf16, #tpu.memory_space<vmem>>, vector<1x1x8x8xbf16>
    %49 = vector.shape_cast %48 : vector<1x1x8x8xbf16> to vector<8x8xbf16>
    %50 = vector.shape_cast %47 : vector<8x8xbf16> to vector<1x1x8x8xbf16>
    tpu.vector_store %arg7[%c1_38, %c2_39, %c0_40, %c0_41], %50 {strides = array<i32>} : memref<3x8x8x8xbf16, #tpu.memory_space<vmem>>, vector<1x1x8x8xbf16>,
    %51 = vector.extract_strided_slice %6 {offsets = [0, 56], sizes = [8, 8], strides = [1, 1]} : vector<16x96xbf16> to vector<8x8xbf16>
    %c1_42 = arith.constant 1 : index
    %c3_43 = arith.constant 3 : index
    %c0_44 = arith.constant 0 : index
    %c0_45 = arith.constant 0 : index
    %52 = vector.load %arg7[%c1_42, %c3_43, %c0_44, %c0_45] : memref<3x8x8x8xbf16, #tpu.memory_space<vmem>>, vector<1x1x8x8xbf16>
    %53 = vector.shape_cast %52 : vector<1x1x8x8xbf16> to vector<8x8xbf16>
    %54 = vector.shape_cast %51 : vector<8x8xbf16> to vector<1x1x8x8xbf16>
    tpu.vector_store %arg7[%c1_42, %c3_43, %c0_44, %c0_45], %54 {strides = array<i32>} : memref<3x8x8x8xbf16, #tpu.memory_space<vmem>>, vector<1x1x8x8xbf16>,
    %55 = vector.extract_strided_slice %6 {offsets = [8, 32], sizes = [8, 8], strides = [1, 1]} : vector<16x96xbf16> to vector<8x8xbf16>
    %c1_46 = arith.constant 1 : index
    %c4_47 = arith.constant 4 : index
    %c0_48 = arith.constant 0 : index
    %c0_49 = arith.constant 0 : index
    %56 = vector.load %arg7[%c1_46, %c4_47, %c0_48, %c0_49] : memref<3x8x8x8xbf16, #tpu.memory_space<vmem>>, vector<1x1x8x8xbf16>
    %57 = vector.shape_cast %56 : vector<1x1x8x8xbf16> to vector<8x8xbf16>
    %58 = vector.shape_cast %55 : vector<8x8xbf16> to vector<1x1x8x8xbf16>
    tpu.vector_store %arg7[%c1_46, %c4_47, %c0_48, %c0_49], %58 {strides = array<i32>} : memref<3x8x8x8xbf16, #tpu.memory_space<vmem>>, vector<1x1x8x8xbf16>,
    %59 = vector.extract_strided_slice %6 {offsets = [8, 40], sizes = [8, 8], strides = [1, 1]} : vector<16x96xbf16> to vector<8x8xbf16>
    %c1_50 = arith.constant 1 : index
    %c5_51 = arith.constant 5 : index
    %c0_52 = arith.constant 0 : index
    %c0_53 = arith.constant 0 : index
    %60 = vector.load %arg7[%c1_50, %c5_51, %c0_52, %c0_53] : memref<3x8x8x8xbf16, #tpu.memory_space<vmem>>, vector<1x1x8x8xbf16>
    %61 = vector.shape_cast %60 : vector<1x1x8x8xbf16> to vector<8x8xbf16>
    %62 = vector.shape_cast %59 : vector<8x8xbf16> to vector<1x1x8x8xbf16>
    tpu.vector_store %arg7[%c1_50, %c5_51, %c0_52, %c0_53], %62 {strides = array<i32>} : memref<3x8x8x8xbf16, #tpu.memory_space<vmem>>, vector<1x1x8x8xbf16>,
    %63 = vector.extract_strided_slice %6 {offsets = [8, 48], sizes = [8, 8], strides = [1, 1]} : vector<16x96xbf16> to vector<8x8xbf16>
    %c1_54 = arith.constant 1 : index
    %c6_55 = arith.constant 6 : index
    %c0_56 = arith.constant 0 : index
    %c0_57 = arith.constant 0 : index
    %64 = vector.load %arg7[%c1_54, %c6_55, %c0_56, %c0_57] : memref<3x8x8x8xbf16, #tpu.memory_space<vmem>>, vector<1x1x8x8xbf16>
    %65 = vector.shape_cast %64 : vector<1x1x8x8xbf16> to vector<8x8xbf16>
    %66 = vector.shape_cast %63 : vector<8x8xbf16> to vector<1x1x8x8xbf16>
    tpu.vector_store %arg7[%c1_54, %c6_55, %c0_56, %c0_57], %66 {strides = array<i32>} : memref<3x8x8x8xbf16, #tpu.memory_space<vmem>>, vector<1x1x8x8xbf16>,
    %67 = vector.extract_strided_slice %6 {offsets = [8, 56], sizes = [8, 8], strides = [1, 1]} : vector<16x96xbf16> to vector<8x8xbf16>
    %c1_58 = arith.constant 1 : index
    %c7_59 = arith.constant 7 : index
    %c0_60 = arith.constant 0 : index
    %c0_61 = arith.constant 0 : index
    %68 = vector.load %arg7[%c1_58, %c7_59, %c0_60, %c0_61] : memref<3x8x8x8xbf16, #tpu.memory_space<vmem>>, vector<1x1x8x8xbf16>
    %69 = vector.shape_cast %68 : vector<1x1x8x8xbf16> to vector<8x8xbf16>
    %70 = vector.shape_cast %67 : vector<8x8xbf16> to vector<1x1x8x8xbf16>
    tpu.vector_store %arg7[%c1_58, %c7_59, %c0_60, %c0_61], %70 {strides = array<i32>} : memref<3x8x8x8xbf16, #tpu.memory_space<vmem>>, vector<1x1x8x8xbf16>,
    %71 = vector.extract_strided_slice %6 {offsets = [0, 64], sizes = [8, 8], strides = [1, 1]} : vector<16x96xbf16> to vector<8x8xbf16>
    %c2_62 = arith.constant 2 : index
    %c0_63 = arith.constant 0 : index
    %c0_64 = arith.constant 0 : index
    %c0_65 = arith.constant 0 : index
    %72 = vector.load %arg7[%c2_62, %c0_63, %c0_64, %c0_65] : memref<3x8x8x8xbf16, #tpu.memory_space<vmem>>, vector<1x1x8x8xbf16>
    %73 = vector.shape_cast %72 : vector<1x1x8x8xbf16> to vector<8x8xbf16>
    %74 = vector.shape_cast %71 : vector<8x8xbf16> to vector<1x1x8x8xbf16>
    tpu.vector_store %arg7[%c2_62, %c0_63, %c0_64, %c0_65], %74 {strides = array<i32>} : memref<3x8x8x8xbf16, #tpu.memory_space<vmem>>, vector<1x1x8x8xbf16>,
    %75 = vector.extract_strided_slice %6 {offsets = [0, 72], sizes = [8, 8], strides = [1, 1]} : vector<16x96xbf16> to vector<8x8xbf16>
    %c2_66 = arith.constant 2 : index
    %c1_67 = arith.constant 1 : index
    %c0_68 = arith.constant 0 : index
    %c0_69 = arith.constant 0 : index
    %76 = vector.load %arg7[%c2_66, %c1_67, %c0_68, %c0_69] : memref<3x8x8x8xbf16, #tpu.memory_space<vmem>>, vector<1x1x8x8xbf16>
    %77 = vector.shape_cast %76 : vector<1x1x8x8xbf16> to vector<8x8xbf16>
    %78 = vector.shape_cast %75 : vector<8x8xbf16> to vector<1x1x8x8xbf16>
    tpu.vector_store %arg7[%c2_66, %c1_67, %c0_68, %c0_69], %78 {strides = array<i32>} : memref<3x8x8x8xbf16, #tpu.memory_space<vmem>>, vector<1x1x8x8xbf16>,
    %79 = vector.extract_strided_slice %6 {offsets = [0, 80], sizes = [8, 8], strides = [1, 1]} : vector<16x96xbf16> to vector<8x8xbf16>
    %c2_70 = arith.constant 2 : index
    %c2_71 = arith.constant 2 : index
    %c0_72 = arith.constant 0 : index
    %c0_73 = arith.constant 0 : index
    %80 = vector.load %arg7[%c2_70, %c2_71, %c0_72, %c0_73] : memref<3x8x8x8xbf16, #tpu.memory_space<vmem>>, vector<1x1x8x8xbf16>
    %81 = vector.shape_cast %80 : vector<1x1x8x8xbf16> to vector<8x8xbf16>
    %82 = vector.shape_cast %79 : vector<8x8xbf16> to vector<1x1x8x8xbf16>
    tpu.vector_store %arg7[%c2_70, %c2_71, %c0_72, %c0_73], %82 {strides = array<i32>} : memref<3x8x8x8xbf16, #tpu.memory_space<vmem>>, vector<1x1x8x8xbf16>,
    %83 = vector.extract_strided_slice %6 {offsets = [0, 88], sizes = [8, 8], strides = [1, 1]} : vector<16x96xbf16> to vector<8x8xbf16>
    %c2_74 = arith.constant 2 : index
    %c3_75 = arith.constant 3 : index
    %c0_76 = arith.constant 0 : index
    %c0_77 = arith.constant 0 : index
    %84 = vector.load %arg7[%c2_74, %c3_75, %c0_76, %c0_77] : memref<3x8x8x8xbf16, #tpu.memory_space<vmem>>, vector<1x1x8x8xbf16>
    %85 = vector.shape_cast %84 : vector<1x1x8x8xbf16> to vector<8x8xbf16>
    %86 = vector.shape_cast %83 : vector<8x8xbf16> to vector<1x1x8x8xbf16>
    tpu.vector_store %arg7[%c2_74, %c3_75, %c0_76, %c0_77], %86 {strides = array<i32>} : memref<3x8x8x8xbf16, #tpu.memory_space<vmem>>, vector<1x1x8x8xbf16>,
    %87 = vector.extract_strided_slice %6 {offsets = [8, 64], sizes = [8, 8], strides = [1, 1]} : vector<16x96xbf16> to vector<8x8xbf16>
    %c2_78 = arith.constant 2 : index
    %c4_79 = arith.constant 4 : index
    %c0_80 = arith.constant 0 : index
    %c0_81 = arith.constant 0 : index
    %88 = vector.load %arg7[%c2_78, %c4_79, %c0_80, %c0_81] : memref<3x8x8x8xbf16, #tpu.memory_space<vmem>>, vector<1x1x8x8xbf16>
    %89 = vector.shape_cast %88 : vector<1x1x8x8xbf16> to vector<8x8xbf16>
    %90 = vector.shape_cast %87 : vector<8x8xbf16> to vector<1x1x8x8xbf16>
    tpu.vector_store %arg7[%c2_78, %c4_79, %c0_80, %c0_81], %90 {strides = array<i32>} : memref<3x8x8x8xbf16, #tpu.memory_space<vmem>>, vector<1x1x8x8xbf16>,
    %91 = vector.extract_strided_slice %6 {offsets = [8, 72], sizes = [8, 8], strides = [1, 1]} : vector<16x96xbf16> to vector<8x8xbf16>
    %c2_82 = arith.constant 2 : index
    %c5_83 = arith.constant 5 : index
    %c0_84 = arith.constant 0 : index
    %c0_85 = arith.constant 0 : index
    %92 = vector.load %arg7[%c2_82, %c5_83, %c0_84, %c0_85] : memref<3x8x8x8xbf16, #tpu.memory_space<vmem>>, vector<1x1x8x8xbf16>
    %93 = vector.shape_cast %92 : vector<1x1x8x8xbf16> to vector<8x8xbf16>
    %94 = vector.shape_cast %91 : vector<8x8xbf16> to vector<1x1x8x8xbf16>
    tpu.vector_store %arg7[%c2_82, %c5_83, %c0_84, %c0_85], %94 {strides = array<i32>} : memref<3x8x8x8xbf16, #tpu.memory_space<vmem>>, vector<1x1x8x8xbf16>,
    %95 = vector.extract_strided_slice %6 {offsets = [8, 80], sizes = [8, 8], strides = [1, 1]} : vector<16x96xbf16> to vector<8x8xbf16>
    %c2_86 = arith.constant 2 : index
    %c6_87 = arith.constant 6 : index
    %c0_88 = arith.constant 0 : index
    %c0_89 = arith.constant 0 : index
    %96 = vector.load %arg7[%c2_86, %c6_87, %c0_88, %c0_89] : memref<3x8x8x8xbf16, #tpu.memory_space<vmem>>, vector<1x1x8x8xbf16>
    %97 = vector.shape_cast %96 : vector<1x1x8x8xbf16> to vector<8x8xbf16>
    %98 = vector.shape_cast %95 : vector<8x8xbf16> to vector<1x1x8x8xbf16>
    tpu.vector_store %arg7[%c2_86, %c6_87, %c0_88, %c0_89], %98 {strides = array<i32>} : memref<3x8x8x8xbf16, #tpu.memory_space<vmem>>, vector<1x1x8x8xbf16>,
    %99 = vector.extract_strided_slice %6 {offsets = [8, 88], sizes = [8, 8], strides = [1, 1]} : vector<16x96xbf16> to vector<8x8xbf16>
    %c2_90 = arith.constant 2 : index
    %c7_91 = arith.constant 7 : index
    %c0_92 = arith.constant 0 : index
    %c0_93 = arith.constant 0 : index
    %100 = vector.load %arg7[%c2_90, %c7_91, %c0_92, %c0_93] : memref<3x8x8x8xbf16, #tpu.memory_space<vmem>>, vector<1x1x8x8xbf16>
    %101 = vector.shape_cast %100 : vector<1x1x8x8xbf16> to vector<8x8xbf16>
    %102 = vector.shape_cast %99 : vector<8x8xbf16> to vector<1x1x8x8xbf16>
    tpu.vector_store %arg7[%c2_90, %c7_91, %c0_92, %c0_93], %102 {strides = array<i32>} : memref<3x8x8x8xbf16, #tpu.memory_space<vmem>>, vector<1x1x8x8xbf16>,
    %c0_94 = arith.constant 0 : index
    %c0_95 = arith.constant 0 : index
    %c0_96 = arith.constant 0 : index
    %c0_97 = arith.constant 0 : index
    %103 = vector.load %arg7[%c0_94, %c0_95, %c0_96, %c0_97] : memref<3x8x8x8xbf16, #tpu.memory_space<vmem>>, vector<1x8x8x8xbf16>
    %104 = vector.shape_cast %103 : vector<1x8x8x8xbf16> to vector<8x8x8xbf16>
    %c1_98 = arith.constant 1 : index
    %c0_99 = arith.constant 0 : index
    %c0_100 = arith.constant 0 : index
    %c0_101 = arith.constant 0 : index
    %105 = vector.load %arg7[%c1_98, %c0_99, %c0_100, %c0_101] : memref<3x8x8x8xbf16, #tpu.memory_space<vmem>>, vector<1x8x8x8xbf16>
    %106 = vector.shape_cast %105 : vector<1x8x8x8xbf16> to vector<8x8x8xbf16>
    %c2_102 = arith.constant 2 : index
    %c0_103 = arith.constant 0 : index
    %c0_104 = arith.constant 0 : index
    %c0_105 = arith.constant 0 : index
    %107 = vector.load %arg7[%c2_102, %c0_103, %c0_104, %c0_105] : memref<3x8x8x8xbf16, #tpu.memory_space<vmem>>, vector<1x8x8x8xbf16>
    %108 = vector.shape_cast %107 : vector<1x8x8x8xbf16> to vector<8x8x8xbf16>
    "tpu.trace_start"() <{level = 10 : i32, message = "gqd,gkd->gqk"}> : () -> ()
    %cst_106 = arith.constant dense<0.000000e+00> : vector<8x8x8xf32>
    %109 = tpu.matmul %104, %106, %cst_106 {dimension_numbers = #tpu.dot_dimension_numbers<[2], [2], [1], [1], [0, 0, 0, 1, 1, 1], [0], [0]>} : vector<8x8x8xbf16>, vector<8x8x8xbf16>, vector<8x8x8xf32> -> vector<8x8x8xf32>
    "tpu.trace_stop"() : () -> ()
    %cst_107 = arith.constant dense<0xFF800000> : vector<8x8xf32>
    %110 = vector.multi_reduction <maximumf>, %109, %cst_107 [2] : vector<8x8x8xf32> to vector<8x8xf32>
    %111 = vector.shape_cast %110 : vector<8x8xf32> to vector<8x8x1xf32>
    %112 = vector.broadcast %111 : vector<8x8x1xf32> to vector<8x8x8xf32>
    %113 = arith.subf %109, %112 : vector<8x8x8xf32>
    %114 = math.exp %113 : vector<8x8x8xf32>
    %cst_108 = arith.constant dense<0.000000e+00> : vector<8x8xf32>
    %115 = vector.multi_reduction <add>, %114, %cst_108 [2] : vector<8x8x8xf32> to vector<8x8xf32>
    %116 = vector.shape_cast %115 : vector<8x8xf32> to vector<8x8x1xf32>
    %117 = tpu.reciprocal %116 {approx = true} : vector<8x8x1xf32> -> vector<8x8x1xf32>
    %118 = vector.broadcast %117 : vector<8x8x1xf32> to vector<8x8x8xf32>
    %119 = arith.mulf %114, %118 : vector<8x8x8xf32>
    %120 = arith.truncf %119 : vector<8x8x8xf32> to vector<8x8x8xbf16>
    "tpu.trace_start"() <{level = 10 : i32, message = "gqk,gkd->gqd"}> : () -> ()
    %cst_109 = arith.constant dense<0.000000e+00> : vector<8x8x8xf32>
    %121 = tpu.matmul %120, %108, %cst_109 {dimension_numbers = #tpu.dot_dimension_numbers<[2], [1], [1], [2], [0, 0, 0, 1, 1, 2], [0], [0]>} : vector<8x8x8xbf16>, vector<8x8x8xbf16>, vector<8x8x8xf32> -> vector<8x8x8xf32>
    "tpu.trace_stop"() : () -> ()
    %122 = vector.extract_strided_slice %121 {offsets = [0, 0, 0], sizes = [1, 8, 8], strides = [1, 1, 1]} : vector<8x8x8xf32> to vector<1x8x8xf32>
    %123 = vector.shape_cast %122 : vector<1x8x8xf32> to vector<8x8xf32>
    %124 = arith.truncf %123 : vector<8x8xf32> to vector<8x8xbf16>
    %c0_110 = arith.constant 0 : index
    %c0_111 = arith.constant 0 : index
    %125 = vector.load %arg8[%c0_110, %c0_111] : memref<16x32xbf16, #tpu.memory_space<vmem>>, vector<8x8xbf16>
    tpu.vector_store %arg8[%c0_110, %c0_111], %124 {strides = array<i32>} : memref<16x32xbf16, #tpu.memory_space<vmem>>, vector<8x8xbf16>,
    %126 = vector.extract_strided_slice %121 {offsets = [1, 0, 0], sizes = [1, 8, 8], strides = [1, 1, 1]} : vector<8x8x8xf32> to vector<1x8x8xf32>
    %127 = vector.shape_cast %126 : vector<1x8x8xf32> to vector<8x8xf32>
    %128 = arith.truncf %127 : vector<8x8xf32> to vector<8x8xbf16>
    %c0_112 = arith.constant 0 : index
    %c8 = arith.constant 8 : index
    %129 = vector.load %arg8[%c0_112, %c8] : memref<16x32xbf16, #tpu.memory_space<vmem>>, vector<8x8xbf16>
    tpu.vector_store %arg8[%c0_112, %c8], %128 {strides = array<i32>} : memref<16x32xbf16, #tpu.memory_space<vmem>>, vector<8x8xbf16>,
    %130 = vector.extract_strided_slice %121 {offsets = [2, 0, 0], sizes = [1, 8, 8], strides = [1, 1, 1]} : vector<8x8x8xf32> to vector<1x8x8xf32>
    %131 = vector.shape_cast %130 : vector<1x8x8xf32> to vector<8x8xf32>
    %132 = arith.truncf %131 : vector<8x8xf32> to vector<8x8xbf16>
    %c0_113 = arith.constant 0 : index
    %c16 = arith.constant 16 : index
    %133 = vector.load %arg8[%c0_113, %c16] : memref<16x32xbf16, #tpu.memory_space<vmem>>, vector<8x8xbf16>
    tpu.vector_store %arg8[%c0_113, %c16], %132 {strides = array<i32>} : memref<16x32xbf16, #tpu.memory_space<vmem>>, vector<8x8xbf16>,
    %134 = vector.extract_strided_slice %121 {offsets = [3, 0, 0], sizes = [1, 8, 8], strides = [1, 1, 1]} : vector<8x8x8xf32> to vector<1x8x8xf32>
    %135 = vector.shape_cast %134 : vector<1x8x8xf32> to vector<8x8xf32>
    %136 = arith.truncf %135 : vector<8x8xf32> to vector<8x8xbf16>
    %c0_114 = arith.constant 0 : index
    %c24 = arith.constant 24 : index
    %137 = vector.load %arg8[%c0_114, %c24] : memref<16x32xbf16, #tpu.memory_space<vmem>>, vector<8x8xbf16>
    tpu.vector_store %arg8[%c0_114, %c24], %136 {strides = array<i32>} : memref<16x32xbf16, #tpu.memory_space<vmem>>, vector<8x8xbf16>,
    %138 = vector.extract_strided_slice %121 {offsets = [4, 0, 0], sizes = [1, 8, 8], strides = [1, 1, 1]} : vector<8x8x8xf32> to vector<1x8x8xf32>
    %139 = vector.shape_cast %138 : vector<1x8x8xf32> to vector<8x8xf32>
    %140 = arith.truncf %139 : vector<8x8xf32> to vector<8x8xbf16>
    %c8_115 = arith.constant 8 : index
    %c0_116 = arith.constant 0 : index
    %141 = vector.load %arg8[%c8_115, %c0_116] : memref<16x32xbf16, #tpu.memory_space<vmem>>, vector<8x8xbf16>
    tpu.vector_store %arg8[%c8_115, %c0_116], %140 {strides = array<i32>} : memref<16x32xbf16, #tpu.memory_space<vmem>>, vector<8x8xbf16>,
    %142 = vector.extract_strided_slice %121 {offsets = [5, 0, 0], sizes = [1, 8, 8], strides = [1, 1, 1]} : vector<8x8x8xf32> to vector<1x8x8xf32>
    %143 = vector.shape_cast %142 : vector<1x8x8xf32> to vector<8x8xf32>
    %144 = arith.truncf %143 : vector<8x8xf32> to vector<8x8xbf16>
    %c8_117 = arith.constant 8 : index
    %c8_118 = arith.constant 8 : index
    %145 = vector.load %arg8[%c8_117, %c8_118] : memref<16x32xbf16, #tpu.memory_space<vmem>>, vector<8x8xbf16>
    tpu.vector_store %arg8[%c8_117, %c8_118], %144 {strides = array<i32>} : memref<16x32xbf16, #tpu.memory_space<vmem>>, vector<8x8xbf16>,
    %146 = vector.extract_strided_slice %121 {offsets = [6, 0, 0], sizes = [1, 8, 8], strides = [1, 1, 1]} : vector<8x8x8xf32> to vector<1x8x8xf32>
    %147 = vector.shape_cast %146 : vector<1x8x8xf32> to vector<8x8xf32>
    %148 = arith.truncf %147 : vector<8x8xf32> to vector<8x8xbf16>
    %c8_119 = arith.constant 8 : index
    %c16_120 = arith.constant 16 : index
    %149 = vector.load %arg8[%c8_119, %c16_120] : memref<16x32xbf16, #tpu.memory_space<vmem>>, vector<8x8xbf16>
    tpu.vector_store %arg8[%c8_119, %c16_120], %148 {strides = array<i32>} : memref<16x32xbf16, #tpu.memory_space<vmem>>, vector<8x8xbf16>,
    %150 = vector.extract_strided_slice %121 {offsets = [7, 0, 0], sizes = [1, 8, 8], strides = [1, 1, 1]} : vector<8x8x8xf32> to vector<1x8x8xf32>
    %151 = vector.shape_cast %150 : vector<1x8x8xf32> to vector<8x8xf32>
    %152 = arith.truncf %151 : vector<8x8xf32> to vector<8x8xbf16>
    %c8_121 = arith.constant 8 : index
    %c24_122 = arith.constant 24 : index
    %153 = vector.load %arg8[%c8_121, %c24_122] : memref<16x32xbf16, #tpu.memory_space<vmem>>, vector<8x8xbf16>
    tpu.vector_store %arg8[%c8_121, %c24_122], %152 {strides = array<i32>} : memref<16x32xbf16, #tpu.memory_space<vmem>>, vector<8x8xbf16>,
    %c0_123 = arith.constant 0 : index
    %c0_124 = arith.constant 0 : index
    %154 = vector.load %arg8[%c0_123, %c0_124] : memref<16x32xbf16, #tpu.memory_space<vmem>>, vector<16x32xbf16>
    %c0_125 = arith.constant 0 : index
    %c0_126 = arith.constant 0 : index
    %155 = vector.load %arg4[%c0_125, %c0_126] : memref<32x32xbf16, #tpu.memory_space<vmem>>, vector<32x32xbf16>
    %cst_127 = arith.constant dense<0.000000e+00> : vector<16x32xf32>
    %156 = tpu.matmul %154, %155, %cst_127 {dimension_numbers = #tpu.dot_dimension_numbers<[1], [0], [0], [1], [0, 0, 1, 1], [], []>} : vector<16x32xbf16>, vector<32x32xbf16>, vector<16x32xf32> -> vector<16x32xf32>
    %c0_128 = arith.constant 0 : index
    %c0_129 = arith.constant 0 : index
    %157 = vector.load %arg5[%c0_128, %c0_129] : memref<1x32xf32, #tpu.memory_space<vmem>>, vector<1x32xf32>
    %158 = vector.broadcast %157 : vector<1x32xf32> to vector<16x32xf32>
    %159 = arith.addf %156, %158 : vector<16x32xf32>
    %c0_130 = arith.constant 0 : index
    %c0_131 = arith.constant 0 : index
    %160 = vector.load %arg6[%c0_130, %c0_131] : memref<16x32xf32, #tpu.memory_space<vmem>>, vector<16x32xf32>
    tpu.vector_store %arg6[%c0_130, %c0_131], %159 {strides = array<i32>} : memref<16x32xf32, #tpu.memory_space<vmem>>, vector<16x32xf32>,
    return
  }
  func.func @transform_0(%arg0: i32) -> (i32, i32) {
    %c0_i32 = arith.constant 0 : i32
    %c0_i32_0 = arith.constant 0 : i32
    return %arg0, %c0_i32 : i32, i32
  }
  func.func @transform_1(%arg0: i32) -> (i32, i32) {
    %c0_i32 = arith.constant 0 : i32
    %c0_i32_0 = arith.constant 0 : i32
    %c0_i32_1 = arith.constant 0 : i32
    return %c0_i32, %c0_i32_0 : i32, i32
  }
  func.func @transform_2(%arg0: i32) -> (i32, i32) {
    %c0_i32 = arith.constant 0 : i32
    %c0_i32_0 = arith.constant 0 : i32
    %c0_i32_1 = arith.constant 0 : i32
    return %c0_i32, %c0_i32_0 : i32, i32
  }
  func.func @transform_3(%arg0: i32) -> (i32, i32) {
    %c0_i32 = arith.constant 0 : i32
    %c0_i32_0 = arith.constant 0 : i32
    %c0_i32_1 = arith.constant 0 : i32
    return %c0_i32, %c0_i32_0 : i32, i32
  }
  func.func @transform_4(%arg0: i32) -> (i32, i32) {
    %c0_i32 = arith.constant 0 : i32
    %c0_i32_0 = arith.constant 0 : i32
    %c0_i32_1 = arith.constant 0 : i32
    return %c0_i32, %c0_i32_0 : i32, i32
  }
  func.func @transform_5(%arg0: i32) -> (i32, i32) {
    %c0_i32 = arith.constant 0 : i32
    %c0_i32_0 = arith.constant 0 : i32
    return %arg0, %c0_i32 : i32, i32
  }
}

</mosaic_0001>

<llo_original>
// kernel: multihead_attention.1
$region0: #{multihead_attention.1}
  #allocation0 [shape = 'u32[]', space=smem, size = 0x4, offset = 0x4, fixed_abs, tag = 'smem constant byte address 0x4 - core index']
  #allocation1 [shape = 'u32[144,128]{1,0:T(1,128)}', space=vmem, size = 0x12000, scoped, tag = 'internal scratch']
  #allocation2 [shape = 'bf16[3,8,8,8]{3,2,1,0:T(8,128)(2,1)}', space=vmem, size = 0xc000, scoped, tag = 'scratch operand']
  #allocation3 [shape = 'bf16[16,32]{1,0:T(16,128)(2,1)}', space=vmem, size = 0x1000, scoped, tag = 'scratch operand']
  %s0 = inlined_call_operand.vmem [shape: bf16[16,32], index: 0, kind: input, shape index: {}]
  %s1 = inlined_call_operand.vmem [shape: bf16[32,96], index: 1, kind: input, shape index: {}]
  %s2 = inlined_call_operand.vmem [shape: f32[1,96], index: 2, kind: input, shape index: {}]
  %s3 = inlined_call_operand.vmem [shape: bf16[32,32], index: 3, kind: input, shape index: {}]
  %s4 = inlined_call_operand.vmem [shape: f32[1,32], index: 4, kind: input, shape index: {}]
  %s5 = inlined_call_operand.hbm [shape: f32[16,32], index: 5, kind: output, shape index: {}]
  %s6 = sld [smem:[#allocation0]]
  $region30: #{multihead_attention.1} parent=0
    _
  %s8 = ssub.s32 1, %s6
  %s9 = scalar_select 0, %s8, %s6
  $region1: #{multihead_attention.1} parent=0
    #allocation4 [shape = 'u8[8192]{0}', space=vmem, size = 0x2000, scoped, tag = 'output window, operand 0, single buffered']
    #allocation5 [shape = 's32[1]{0}', space=sflag, size = 0x4, scoped, tag = 'scoped memory for multihead_attention.1']
    %10 = vsyncpa [#allocation5], 0
    // Predicated region
    $region2: #{multihead_attention.1} parent=1 // pred_check
      _
    $region3: #{multihead_attention.1} parent=1 // pred_check_branch
      %12 = sbr.rel (0) target = $region5
    $region4: #{multihead_attention.1} parent=1 // pred_region
      _
    $region5: #{multihead_attention.1} parent=1 // pred_fallthru
      _
    // Predicated region
    $region6: #{multihead_attention.1} parent=1 // pred_check
      _
    $region7: #{multihead_attention.1} parent=1 // pred_check_branch
      %14 = sbr.rel (0) target = $region9
    $region8: #{multihead_attention.1} parent=1 // pred_region
      _
    $region9: #{multihead_attention.1} parent=1 // pred_fallthru
      _
    // Predicated region
    $region10: #{multihead_attention.1} parent=1 // pred_check
      _
    $region11: #{multihead_attention.1} parent=1 // pred_check_branch
      %16 = sbr.rel (0) target = $region13
    $region12: #{multihead_attention.1} parent=1 // pred_region
      _
    $region13: #{multihead_attention.1} parent=1 // pred_fallthru
      _
    // Predicated region
    $region14: #{multihead_attention.1} parent=1 // pred_check
      _
    $region15: #{multihead_attention.1} parent=1 // pred_check_branch
      %18 = sbr.rel (0) target = $region17
    $region16: #{multihead_attention.1} parent=1 // pred_region
      _
    $region17: #{multihead_attention.1} parent=1 // pred_fallthru
      _
    // Predicated region
    $region18: #{multihead_attention.1} parent=1 // pred_check
      _
    $region19: #{multihead_attention.1} parent=1 // pred_check_branch
      %20 = sbr.rel (0) target = $region21
    $region20: #{multihead_attention.1} parent=1 // pred_region
      _
    $region21: #{multihead_attention.1} parent=1 // pred_fallthru
      _
    %v22 = vld [vmem:[%s0] sm:$0xf]
    %v23 = vld [vmem:[%s0 + $0x4] sm:$0xf]
    %v24 = vld [vmem:[%s1] sm:$0xf]
    %v25 = vld [vmem:[%s1 + $0x4] sm:$0xf]
    %v26 = vld [vmem:[%s1 + $0x8] sm:$0xf]
    %v27 = vld [vmem:[%s1 + $0xc] sm:$0xf]
    %v28 = vld [vmem:[%s2] sm:$0x1]
    %v30 = vlaneseq
    %v31 = vshrl.u32 %v30, 7
    %v32 = vsub.s32 0, %v31
    %v33 = vrot.slane %v28, %v32
    %v37 = vunpack.c.l.b16 %v22
    %v38 = vunpack.c.l.b16 %v23
    %v39 = vpack.c.b16 %v38, %v37
    %v44 = vunpack.c.l.b16 %v24
    %v45 = vunpack.c.l.b16 %v25
    %v46 = vunpack.c.l.b16 %v26
    %v47 = vunpack.c.l.b16 %v27
    %v48 = vpack.c.b16 %v45, %v44
    %v49 = vpack.c.b16 %v47, %v46
    %vm52 = vcmask 261120
    %v54 = vsel %vm52, %v39, 0
    %56 = vmatprep.subr.bf16.mxu0 0
    %57 = vmatpush1.bf16.msra.mxu0 %v48
    %58 = vmatprep.subr.bf16.mxu0 0
    %59 = vmatpush1.bf16.msra.mxu0 %v49
    %60 = vmatprep.subr.bf16.mxu0 0
    %61 = vmatpush1.bf16.msra.mxu0 0
    %62 = vmatprep.subr.bf16.mxu0 0
    %63 = vmatpush1.bf16.msra.mxu0 0
    %64 = vmatprep.subr.bf16.mxu0 0
    %65 = vmatpush1.bf16.msra.mxu0 0
    %66 = vmatprep.subr.bf16.mxu0 0
    %67 = vmatpush1.bf16.msra.mxu0 0
    %68 = vmatprep.subr.bf16.mxu0 0
    %69 = vmatpush1.bf16.msra.mxu0 0
    %70 = vmatprep.subr.bf16.mxu0 0
    %71 = vmatpush1.bf16.msra.mxu0 0
    %72 = vmatprep.subr.bf16.mxu0 0
    %73 = vmatpush1.bf16.msra.mxu0 0
    %74 = vmatprep.subr.bf16.mxu0 0
    %75 = vmatpush1.bf16.msra.mxu0 0
    %76 = vmatprep.subr.bf16.mxu0 0
    %77 = vmatpush1.bf16.msra.mxu0 0
    %78 = vmatprep.subr.bf16.mxu0 0
    %79 = vmatpush1.bf16.msra.mxu0 0
    %80 = vmatprep.subr.bf16.mxu0 0
    %81 = vmatpush1.bf16.msra.mxu0 0
    %82 = vmatprep.subr.bf16.mxu0 0
    %83 = vmatpush1.bf16.msra.mxu0 0
    %84 = vmatprep.subr.bf16.mxu0 0
    %85 = vmatpush1.bf16.msra.mxu0 0
    %86 = vmatprep.subr.bf16.mxu0 0
    %87 = vmatpush1.bf16.msra.mxu0 0
    %88 = vmatprep.mubr.bf16.mxu0 0
    %89 = vmatmul.mubr.bf16.gmra.mrb[0].mxu0 %v54
    %v90 = vpop.f32.mrb[0].mxu0
    %v91 = vadd.f32 %v33, %v90
    %v92 = vpop.f32.mrb[0].mxu0
    %v93 = vpop.f32.mrb[0].mxu0
    %v94 = vadd.f32 %v33, %v93
    %v95 = vpop.f32.mrb[0].mxu0
    %96 = vdwg.mxu0
    %v97 = vpack.c.bf16 %v94, %v91
    %vm98 = vcmask 60416
    %99 = vst.msk [vmem:[#allocation2] sm:$0xf] %vm98, %v97
    %v101 = vunpack.c.l.b16 %v97
    %v102 = vpack.c.b16 %v101, %v101
    %103 = vrot.lane.b32.xlu0 %v102, 120
    %v104 = vpop.permute.xlu0 %103
    %s106 = scalar_lea.vmem [#allocation2], 4
    %107 = vst.msk [vmem:[%s106] sm:$0xf] %vm98, %v104
    %108 = vrot.lane.b32.xlu0 %v102, 112
    %v109 = vpop.permute.xlu0 %108
    %s111 = scalar_lea.vmem [#allocation2], 8
    %112 = vst.msk [vmem:[%s111] sm:$0xf] %vm98, %v109
    %113 = vrot.lane.b32.xlu0 %v102, 104
    %v114 = vpop.permute.xlu0 %113
    %s116 = scalar_lea.vmem [#allocation2], 12
    %117 = vst.msk [vmem:[%s116] sm:$0xf] %vm98, %v114
    %v118 = vunpack.c.h.b16 %v97
    %v119 = vpack.c.b16 %v118, %v118
    %s121 = scalar_lea.vmem [#allocation2], 16
    %122 = vst.msk [vmem:[%s121] sm:$0xf] %vm98, %v119
    %123 = vrot.lane.b32.xlu0 %v119, 120
    %v124 = vpop.permute.xlu0 %123
    %s126 = scalar_lea.vmem [#allocation2], 20
    %127 = vst.msk [vmem:[%s126] sm:$0xf] %vm98, %v124
    %128 = vrot.lane.b32.xlu0 %v119, 112
    %v129 = vpop.permute.xlu0 %128
    %s131 = scalar_lea.vmem [#allocation2], 24
    %132 = vst.msk [vmem:[%s131] sm:$0xf] %vm98, %v129
    %133 = vrot.lane.b32.xlu0 %v119, 104
    %v134 = vpop.permute.xlu0 %133
    %s136 = scalar_lea.vmem [#allocation2], 28
    %137 = vst.msk [vmem:[%s136] sm:$0xf] %vm98, %v134
    %138 = vrot.lane.b32.xlu0 %v102, 96
    %v139 = vpop.permute.xlu0 %138
    %s141 = scalar_lea.vmem [#allocation2], 32
    %142 = vst.msk [vmem:[%s141] sm:$0xf] %vm98, %v139
    %143 = vrot.lane.b32.xlu0 %v102, 88
    %v144 = vpop.permute.xlu0 %143
    %s146 = scalar_lea.vmem [#allocation2], 36
    %147 = vst.msk [vmem:[%s146] sm:$0xf] %vm98, %v144
    %148 = vrot.lane.b32.xlu0 %v102, 80
    %v149 = vpop.permute.xlu0 %148
    %s151 = scalar_lea.vmem [#allocation2], 40
    %152 = vst.msk [vmem:[%s151] sm:$0xf] %vm98, %v149
    %153 = vrot.lane.b32.xlu0 %v102, 72
    %v154 = vpop.permute.xlu0 %153
    %s156 = scalar_lea.vmem [#allocation2], 44
    %157 = vst.msk [vmem:[%s156] sm:$0xf] %vm98, %v154
    %158 = vrot.lane.b32.xlu0 %v119, 96
    %v159 = vpop.permute.xlu0 %158
    %s161 = scalar_lea.vmem [#allocation2], 48
    %162 = vst.msk [vmem:[%s161] sm:$0xf] %vm98, %v159
    %163 = vrot.lane.b32.xlu0 %v119, 88
    %v164 = vpop.permute.xlu0 %163
    %s166 = scalar_lea.vmem [#allocation2], 52
    %167 = vst.msk [vmem:[%s166] sm:$0xf] %vm98, %v164
    %168 = vrot.lane.b32.xlu0 %v119, 80
    %v169 = vpop.permute.xlu0 %168
    %s171 = scalar_lea.vmem [#allocation2], 56
    %172 = vst.msk [vmem:[%s171] sm:$0xf] %vm98, %v169
    %173 = vrot.lane.b32.xlu0 %v119, 72
    %v174 = vpop.permute.xlu0 %173
    %s176 = scalar_lea.vmem [#allocation2], 60
    %177 = vst.msk [vmem:[%s176] sm:$0xf] %vm98, %v174
    %178 = vrot.lane.b32.xlu0 %v102, 64
    %v179 = vpop.permute.xlu0 %178
    %s181 = scalar_lea.vmem [#allocation2], 64
    %182 = vst.msk [vmem:[%s181] sm:$0xf] %vm98, %v179
    %183 = vrot.lane.b32.xlu0 %v102, 56
    %v184 = vpop.permute.xlu0 %183
    %s186 = scalar_lea.vmem [#allocation2], 68
    %187 = vst.msk [vmem:[%s186] sm:$0xf] %vm98, %v184
    %188 = vrot.lane.b32.xlu0 %v102, 48
    %v189 = vpop.permute.xlu0 %188
    %s191 = scalar_lea.vmem [#allocation2], 72
    %192 = vst.msk [vmem:[%s191] sm:$0xf] %vm98, %v189
    %193 = vrot.lane.b32.xlu0 %v102, 40
    %v194 = vpop.permute.xlu0 %193
    %s196 = scalar_lea.vmem [#allocation2], 76
    %197 = vst.msk [vmem:[%s196] sm:$0xf] %vm98, %v194
    %198 = vrot.lane.b32.xlu0 %v119, 64
    %v199 = vpop.permute.xlu0 %198
    %s201 = scalar_lea.vmem [#allocation2], 80
    %202 = vst.msk [vmem:[%s201] sm:$0xf] %vm98, %v199
    %203 = vrot.lane.b32.xlu0 %v119, 56
    %v204 = vpop.permute.xlu0 %203
    %s206 = scalar_lea.vmem [#allocation2], 84
    %207 = vst.msk [vmem:[%s206] sm:$0xf] %vm98, %v204
    %208 = vrot.lane.b32.xlu0 %v119, 48
    %v209 = vpop.permute.xlu0 %208
    %s211 = scalar_lea.vmem [#allocation2], 88
    %212 = vst.msk [vmem:[%s211] sm:$0xf] %vm98, %v209
    %213 = vrot.lane.b32.xlu0 %v119, 40
    %v214 = vpop.permute.xlu0 %213
    %s216 = scalar_lea.vmem [#allocation2], 92
    %217 = vst.msk [vmem:[%s216] sm:$0xf] %vm98, %v214
    %v218 = vld [vmem:[#allocation2] sm:$0xf]
    %v219 = vld [vmem:[#allocation2 + $0x4] sm:$0xf]
    %v220 = vld [vmem:[#allocation2 + $0x8] sm:$0xf]
    %v221 = vld [vmem:[#allocation2 + $0xc] sm:$0xf]
    %v222 = vld [vmem:[#allocation2 + $0x10] sm:$0xf]
    %v223 = vld [vmem:[#allocation2 + $0x14] sm:$0xf]
    %v224 = vld [vmem:[#allocation2 + $0x18] sm:$0xf]
    %v225 = vld [vmem:[#allocation2 + $0x1c] sm:$0xf]
    %v226 = vld [vmem:[%s141] sm:$0xf]
    %v227 = vld [vmem:[%s141 + $0x4] sm:$0xf]
    %v228 = vld [vmem:[%s141 + $0x8] sm:$0xf]
    %v229 = vld [vmem:[%s141 + $0xc] sm:$0xf]
    %v230 = vld [vmem:[%s141 + $0x10] sm:$0xf]
    %v231 = vld [vmem:[%s141 + $0x14] sm:$0xf]
    %v232 = vld [vmem:[%s141 + $0x18] sm:$0xf]
    %v233 = vld [vmem:[%s141 + $0x1c] sm:$0xf]
    %v234 = vld [vmem:[%s181] sm:$0xf]
    %v235 = vld [vmem:[%s181 + $0x4] sm:$0xf]
    %v236 = vld [vmem:[%s181 + $0x8] sm:$0xf]
    %v237 = vld [vmem:[%s181 + $0xc] sm:$0xf]
    %v238 = vld [vmem:[%s181 + $0x10] sm:$0xf]
    %v239 = vld [vmem:[%s181 + $0x14] sm:$0xf]
    %v240 = vld [vmem:[%s181 + $0x18] sm:$0xf]
    %v241 = vld [vmem:[%s181 + $0x1c] sm:$0xf]
    %vm242 = vcmask 64512
    %v244 = vsel %vm242, %v218, 0
    %v247 = vsel %vm242, %v226, 0
    %249 = vmatprep.subr.bf16.mxu0 0
    %250 = vmatpush1.bf16.xpose.msra.mxu0 %v247
    %251 = vmatprep.subr.bf16.mxu0 0
    %252 = vmatpush1.bf16.xpose.msra.mxu0 0
    %253 = vmatprep.subr.bf16.mxu0 0
    %254 = vmatpush1.bf16.xpose.msra.mxu0 0
    %255 = vmatprep.subr.bf16.mxu0 0
    %256 = vmatpush1.bf16.xpose.msra.mxu0 0
    %257 = vmatprep.subr.bf16.mxu0 0
    %258 = vmatpush1.bf16.xpose.msra.mxu0 0
    %259 = vmatprep.subr.bf16.mxu0 0
    %260 = vmatpush1.bf16.xpose.msra.mxu0 0
    %261 = vmatprep.subr.bf16.mxu0 0
    %262 = vmatpush1.bf16.xpose.msra.mxu0 0
    %263 = vmatprep.subr.bf16.mxu0 0
    %264 = vmatpush1.bf16.xpose.msra.mxu0 0
    %265 = vmatprep.subr.bf16.mxu0 0
    %266 = vmatpush1.bf16.xpose.msra.mxu0 0
    %267 = vmatprep.subr.bf16.mxu0 0
    %268 = vmatpush1.bf16.xpose.msra.mxu0 0
    %269 = vmatprep.subr.bf16.mxu0 0
    %270 = vmatpush1.bf16.xpose.msra.mxu0 0
    %271 = vmatprep.subr.bf16.mxu0 0
    %272 = vmatpush1.bf16.xpose.msra.mxu0 0
    %273 = vmatprep.subr.bf16.mxu0 0
    %274 = vmatpush1.bf16.xpose.msra.mxu0 0
    %275 = vmatprep.subr.bf16.mxu0 0
    %276 = vmatpush1.bf16.xpose.msra.mxu0 0
    %277 = vmatprep.subr.bf16.mxu0 0
    %278 = vmatpush1.bf16.xpose.msra.mxu0 0
    %279 = vmatprep.subr.bf16.mxu0 0
    %280 = vmatpush1.bf16.xpose.msra.mxu0 0
    %281 = vmatprep.mubr.bf16.mxu0 0
    %282 = vmatmul.mubr.bf16.gmra.mrb[0].mxu0 %v244
    %v283 = vpop.f32.mrb[0].mxu0
    %v284 = vadd.f32 0.0, %v283
    %v285 = vpop.f32.mrb[0].mxu0
    %v286 = vpop.f32.mrb[0].mxu0
    %v287 = vpop.f32.mrb[0].mxu0
    %288 = vdwg.mxu0
    %v290 = vsel %vm242, %v219, 0
    %v293 = vsel %vm242, %v227, 0
    %295 = vmatprep.subr.bf16.mxu0 0
    %296 = vmatpush1.bf16.xpose.msra.mxu0 %v293
    %297 = vmatprep.subr.bf16.mxu0 0
    %298 = vmatpush1.bf16.xpose.msra.mxu0 0
    %299 = vmatprep.subr.bf16.mxu0 0
    %300 = vmatpush1.bf16.xpose.msra.mxu0 0
    %301 = vmatprep.subr.bf16.mxu0 0
    %302 = vmatpush1.bf16.xpose.msra.mxu0 0
    %303 = vmatprep.subr.bf16.mxu0 0
    %304 = vmatpush1.bf16.xpose.msra.mxu0 0
    %305 = vmatprep.subr.bf16.mxu0 0
    %306 = vmatpush1.bf16.xpose.msra.mxu0 0
    %307 = vmatprep.subr.bf16.mxu0 0
    %308 = vmatpush1.bf16.xpose.msra.mxu0 0
    %309 = vmatprep.subr.bf16.mxu0 0
    %310 = vmatpush1.bf16.xpose.msra.mxu0 0
    %311 = vmatprep.subr.bf16.mxu0 0
    %312 = vmatpush1.bf16.xpose.msra.mxu0 0
    %313 = vmatprep.subr.bf16.mxu0 0
    %314 = vmatpush1.bf16.xpose.msra.mxu0 0
    %315 = vmatprep.subr.bf16.mxu0 0
    %316 = vmatpush1.bf16.xpose.msra.mxu0 0
    %317 = vmatprep.subr.bf16.mxu0 0
    %318 = vmatpush1.bf16.xpose.msra.mxu0 0
    %319 = vmatprep.subr.bf16.mxu0 0
    %320 = vmatpush1.bf16.xpose.msra.mxu0 0
    %321 = vmatprep.subr.bf16.mxu0 0
    %322 = vmatpush1.bf16.xpose.msra.mxu0 0
    %323 = vmatprep.subr.bf16.mxu0 0
    %324 = vmatpush1.bf16.xpose.msra.mxu0 0
    %325 = vmatprep.subr.bf16.mxu0 0
    %326 = vmatpush1.bf16.xpose.msra.mxu0 0
    %327 = vmatprep.mubr.bf16.mxu0 0
    %328 = vmatmul.mubr.bf16.gmra.mrb[0].mxu0 %v290
    %v329 = vpop.f32.mrb[0].mxu0
    %v330 = vadd.f32 0.0, %v329
    %v331 = vpop.f32.mrb[0].mxu0
    %v332 = vpop.f32.mrb[0].mxu0
    %v333 = vpop.f32.mrb[0].mxu0
    %334 = vdwg.mxu0
    %v336 = vsel %vm242, %v220, 0
    %v339 = vsel %vm242, %v228, 0
    %341 = vmatprep.subr.bf16.mxu0 0
    %342 = vmatpush1.bf16.xpose.msra.mxu0 %v339
    %343 = vmatprep.subr.bf16.mxu0 0
    %344 = vmatpush1.bf16.xpose.msra.mxu0 0
    %345 = vmatprep.subr.bf16.mxu0 0
    %346 = vmatpush1.bf16.xpose.msra.mxu0 0
    %347 = vmatprep.subr.bf16.mxu0 0
    %348 = vmatpush1.bf16.xpose.msra.mxu0 0
    %349 = vmatprep.subr.bf16.mxu0 0
    %350 = vmatpush1.bf16.xpose.msra.mxu0 0
    %351 = vmatprep.subr.bf16.mxu0 0
    %352 = vmatpush1.bf16.xpose.msra.mxu0 0
    %353 = vmatprep.subr.bf16.mxu0 0
    %354 = vmatpush1.bf16.xpose.msra.mxu0 0
    %355 = vmatprep.subr.bf16.mxu0 0
    %356 = vmatpush1.bf16.xpose.msra.mxu0 0
    %357 = vmatprep.subr.bf16.mxu0 0
    %358 = vmatpush1.bf16.xpose.msra.mxu0 0
    %359 = vmatprep.subr.bf16.mxu0 0
    %360 = vmatpush1.bf16.xpose.msra.mxu0 0
    %361 = vmatprep.subr.bf16.mxu0 0
    %362 = vmatpush1.bf16.xpose.msra.mxu0 0
    %363 = vmatprep.subr.bf16.mxu0 0
    %364 = vmatpush1.bf16.xpose.msra.mxu0 0
    %365 = vmatprep.subr.bf16.mxu0 0
    %366 = vmatpush1.bf16.xpose.msra.mxu0 0
    %367 = vmatprep.subr.bf16.mxu0 0
    %368 = vmatpush1.bf16.xpose.msra.mxu0 0
    %369 = vmatprep.subr.bf16.mxu0 0
    %370 = vmatpush1.bf16.xpose.msra.mxu0 0
    %371 = vmatprep.subr.bf16.mxu0 0
    %372 = vmatpush1.bf16.xpose.msra.mxu0 0
    %373 = vmatprep.mubr.bf16.mxu0 0
    %374 = vmatmul.mubr.bf16.gmra.mrb[0].mxu0 %v336
    %v375 = vpop.f32.mrb[0].mxu0
    %v376 = vadd.f32 0.0, %v375
    %v377 = vpop.f32.mrb[0].mxu0
    %v378 = vpop.f32.mrb[0].mxu0
    %v379 = vpop.f32.mrb[0].mxu0
    %380 = vdwg.mxu0
    %v382 = vsel %vm242, %v221, 0
    %v385 = vsel %vm242, %v229, 0
    %387 = vmatprep.subr.bf16.mxu0 0
    %388 = vmatpush1.bf16.xpose.msra.mxu0 %v385
    %389 = vmatprep.subr.bf16.mxu0 0
    %390 = vmatpush1.bf16.xpose.msra.mxu0 0
    %391 = vmatprep.subr.bf16.mxu0 0
    %392 = vmatpush1.bf16.xpose.msra.mxu0 0
    %393 = vmatprep.subr.bf16.mxu0 0
    %394 = vmatpush1.bf16.xpose.msra.mxu0 0
    %395 = vmatprep.subr.bf16.mxu0 0
    %396 = vmatpush1.bf16.xpose.msra.mxu0 0
    %397 = vmatprep.subr.bf16.mxu0 0
    %398 = vmatpush1.bf16.xpose.msra.mxu0 0
    %399 = vmatprep.subr.bf16.mxu0 0
    %400 = vmatpush1.bf16.xpose.msra.mxu0 0
    %401 = vmatprep.subr.bf16.mxu0 0
    %402 = vmatpush1.bf16.xpose.msra.mxu0 0
    %403 = vmatprep.subr.bf16.mxu0 0
    %404 = vmatpush1.bf16.xpose.msra.mxu0 0
    %405 = vmatprep.subr.bf16.mxu0 0
    %406 = vmatpush1.bf16.xpose.msra.mxu0 0
    %407 = vmatprep.subr.bf16.mxu0 0
    %408 = vmatpush1.bf16.xpose.msra.mxu0 0
    %409 = vmatprep.subr.bf16.mxu0 0
    %410 = vmatpush1.bf16.xpose.msra.mxu0 0
    %411 = vmatprep.subr.bf16.mxu0 0
    %412 = vmatpush1.bf16.xpose.msra.mxu0 0
    %413 = vmatprep.subr.bf16.mxu0 0
    %414 = vmatpush1.bf16.xpose.msra.mxu0 0
    %415 = vmatprep.subr.bf16.mxu0 0
    %416 = vmatpush1.bf16.xpose.msra.mxu0 0
    %417 = vmatprep.subr.bf16.mxu0 0
    %418 = vmatpush1.bf16.xpose.msra.mxu0 0
    %419 = vmatprep.mubr.bf16.mxu0 0
    %420 = vmatmul.mubr.bf16.gmra.mrb[0].mxu0 %v382
    %v421 = vpop.f32.mrb[0].mxu0
    %v422 = vadd.f32 0.0, %v421
    %v423 = vpop.f32.mrb[0].mxu0
    %v424 = vpop.f32.mrb[0].mxu0
    %v425 = vpop.f32.mrb[0].mxu0
    %426 = vdwg.mxu0
    %v428 = vsel %vm242, %v222, 0
    %v431 = vsel %vm242, %v230, 0
    %433 = vmatprep.subr.bf16.mxu0 0
    %434 = vmatpush1.bf16.xpose.msra.mxu0 %v431
    %435 = vmatprep.subr.bf16.mxu0 0
    %436 = vmatpush1.bf16.xpose.msra.mxu0 0
    %437 = vmatprep.subr.bf16.mxu0 0
    %438 = vmatpush1.bf16.xpose.msra.mxu0 0
    %439 = vmatprep.subr.bf16.mxu0 0
    %440 = vmatpush1.bf16.xpose.msra.mxu0 0
    %441 = vmatprep.subr.bf16.mxu0 0
    %442 = vmatpush1.bf16.xpose.msra.mxu0 0
    %443 = vmatprep.subr.bf16.mxu0 0
    %444 = vmatpush1.bf16.xpose.msra.mxu0 0
    %445 = vmatprep.subr.bf16.mxu0 0
    %446 = vmatpush1.bf16.xpose.msra.mxu0 0
    %447 = vmatprep.subr.bf16.mxu0 0
    %448 = vmatpush1.bf16.xpose.msra.mxu0 0
    %449 = vmatprep.subr.bf16.mxu0 0
    %450 = vmatpush1.bf16.xpose.msra.mxu0 0
    %451 = vmatprep.subr.bf16.mxu0 0
    %452 = vmatpush1.bf16.xpose.msra.mxu0 0
    %453 = vmatprep.subr.bf16.mxu0 0
    %454 = vmatpush1.bf16.xpose.msra.mxu0 0
    %455 = vmatprep.subr.bf16.mxu0 0
    %456 = vmatpush1.bf16.xpose.msra.mxu0 0
    %457 = vmatprep.subr.bf16.mxu0 0
    %458 = vmatpush1.bf16.xpose.msra.mxu0 0
    %459 = vmatprep.subr.bf16.mxu0 0
    %460 = vmatpush1.bf16.xpose.msra.mxu0 0
    %461 = vmatprep.subr.bf16.mxu0 0
    %462 = vmatpush1.bf16.xpose.msra.mxu0 0
    %463 = vmatprep.subr.bf16.mxu0 0
    %464 = vmatpush1.bf16.xpose.msra.mxu0 0
    %465 = vmatprep.mubr.bf16.mxu0 0
    %466 = vmatmul.mubr.bf16.gmra.mrb[0].mxu0 %v428
    %v467 = vpop.f32.mrb[0].mxu0
    %v468 = vadd.f32 0.0, %v467
    %v469 = vpop.f32.mrb[0].mxu0
    %v470 = vpop.f32.mrb[0].mxu0
    %v471 = vpop.f32.mrb[0].mxu0
    %472 = vdwg.mxu0
    %v474 = vsel %vm242, %v223, 0
    %v477 = vsel %vm242, %v231, 0
    %479 = vmatprep.subr.bf16.mxu0 0
    %480 = vmatpush1.bf16.xpose.msra.mxu0 %v477
    %481 = vmatprep.subr.bf16.mxu0 0
    %482 = vmatpush1.bf16.xpose.msra.mxu0 0
    %483 = vmatprep.subr.bf16.mxu0 0
    %484 = vmatpush1.bf16.xpose.msra.mxu0 0
    %485 = vmatprep.subr.bf16.mxu0 0
    %486 = vmatpush1.bf16.xpose.msra.mxu0 0
    %487 = vmatprep.subr.bf16.mxu0 0
    %488 = vmatpush1.bf16.xpose.msra.mxu0 0
    %489 = vmatprep.subr.bf16.mxu0 0
    %490 = vmatpush1.bf16.xpose.msra.mxu0 0
    %491 = vmatprep.subr.bf16.mxu0 0
    %492 = vmatpush1.bf16.xpose.msra.mxu0 0
    %493 = vmatprep.subr.bf16.mxu0 0
    %494 = vmatpush1.bf16.xpose.msra.mxu0 0
    %495 = vmatprep.subr.bf16.mxu0 0
    %496 = vmatpush1.bf16.xpose.msra.mxu0 0
    %497 = vmatprep.subr.bf16.mxu0 0
    %498 = vmatpush1.bf16.xpose.msra.mxu0 0
    %499 = vmatprep.subr.bf16.mxu0 0
    %500 = vmatpush1.bf16.xpose.msra.mxu0 0
    %501 = vmatprep.subr.bf16.mxu0 0
    %502 = vmatpush1.bf16.xpose.msra.mxu0 0
    %503 = vmatprep.subr.bf16.mxu0 0
    %504 = vmatpush1.bf16.xpose.msra.mxu0 0
    %505 = vmatprep.subr.bf16.mxu0 0
    %506 = vmatpush1.bf16.xpose.msra.mxu0 0
    %507 = vmatprep.subr.bf16.mxu0 0
    %508 = vmatpush1.bf16.xpose.msra.mxu0 0
    %509 = vmatprep.subr.bf16.mxu0 0
    %510 = vmatpush1.bf16.xpose.msra.mxu0 0
    %511 = vmatprep.mubr.bf16.mxu0 0
    %512 = vmatmul.mubr.bf16.gmra.mrb[0].mxu0 %v474
    %v513 = vpop.f32.mrb[0].mxu0
    %v514 = vadd.f32 0.0, %v513
    %v515 = vpop.f32.mrb[0].mxu0
    %v516 = vpop.f32.mrb[0].mxu0
    %v517 = vpop.f32.mrb[0].mxu0
    %518 = vdwg.mxu0
    %v520 = vsel %vm242, %v224, 0
    %v523 = vsel %vm242, %v232, 0
    %525 = vmatprep.subr.bf16.mxu0 0
    %526 = vmatpush1.bf16.xpose.msra.mxu0 %v523
    %527 = vmatprep.subr.bf16.mxu0 0
    %528 = vmatpush1.bf16.xpose.msra.mxu0 0
    %529 = vmatprep.subr.bf16.mxu0 0
    %530 = vmatpush1.bf16.xpose.msra.mxu0 0
    %531 = vmatprep.subr.bf16.mxu0 0
    %532 = vmatpush1.bf16.xpose.msra.mxu0 0
    %533 = vmatprep.subr.bf16.mxu0 0
    %534 = vmatpush1.bf16.xpose.msra.mxu0 0
    %535 = vmatprep.subr.bf16.mxu0 0
    %536 = vmatpush1.bf16.xpose.msra.mxu0 0
    %537 = vmatprep.subr.bf16.mxu0 0
    %538 = vmatpush1.bf16.xpose.msra.mxu0 0
    %539 = vmatprep.subr.bf16.mxu0 0
    %540 = vmatpush1.bf16.xpose.msra.mxu0 0
    %541 = vmatprep.subr.bf16.mxu0 0
    %542 = vmatpush1.bf16.xpose.msra.mxu0 0
    %543 = vmatprep.subr.bf16.mxu0 0
    %544 = vmatpush1.bf16.xpose.msra.mxu0 0
    %545 = vmatprep.subr.bf16.mxu0 0
    %546 = vmatpush1.bf16.xpose.msra.mxu0 0
    %547 = vmatprep.subr.bf16.mxu0 0
    %548 = vmatpush1.bf16.xpose.msra.mxu0 0
    %549 = vmatprep.subr.bf16.mxu0 0
    %550 = vmatpush1.bf16.xpose.msra.mxu0 0
    %551 = vmatprep.subr.bf16.mxu0 0
    %552 = vmatpush1.bf16.xpose.msra.mxu0 0
    %553 = vmatprep.subr.bf16.mxu0 0
    %554 = vmatpush1.bf16.xpose.msra.mxu0 0
    %555 = vmatprep.subr.bf16.mxu0 0
    %556 = vmatpush1.bf16.xpose.msra.mxu0 0
    %557 = vmatprep.mubr.bf16.mxu0 0
    %558 = vmatmul.mubr.bf16.gmra.mrb[0].mxu0 %v520
    %v559 = vpop.f32.mrb[0].mxu0
    %v560 = vadd.f32 0.0, %v559
    %v561 = vpop.f32.mrb[0].mxu0
    %v562 = vpop.f32.mrb[0].mxu0
    %v563 = vpop.f32.mrb[0].mxu0
    %564 = vdwg.mxu0
    %v566 = vsel %vm242, %v225, 0
    %v569 = vsel %vm242, %v233, 0
    %571 = vmatprep.subr.bf16.mxu0 0
    %572 = vmatpush1.bf16.xpose.msra.mxu0 %v569
    %573 = vmatprep.subr.bf16.mxu0 0
    %574 = vmatpush1.bf16.xpose.msra.mxu0 0
    %575 = vmatprep.subr.bf16.mxu0 0
    %576 = vmatpush1.bf16.xpose.msra.mxu0 0
    %577 = vmatprep.subr.bf16.mxu0 0
    %578 = vmatpush1.bf16.xpose.msra.mxu0 0
    %579 = vmatprep.subr.bf16.mxu0 0
    %580 = vmatpush1.bf16.xpose.msra.mxu0 0
    %581 = vmatprep.subr.bf16.mxu0 0
    %582 = vmatpush1.bf16.xpose.msra.mxu0 0
    %583 = vmatprep.subr.bf16.mxu0 0
    %584 = vmatpush1.bf16.xpose.msra.mxu0 0
    %585 = vmatprep.subr.bf16.mxu0 0
    %586 = vmatpush1.bf16.xpose.msra.mxu0 0
    %587 = vmatprep.subr.bf16.mxu0 0
    %588 = vmatpush1.bf16.xpose.msra.mxu0 0
    %589 = vmatprep.subr.bf16.mxu0 0
    %590 = vmatpush1.bf16.xpose.msra.mxu0 0
    %591 = vmatprep.subr.bf16.mxu0 0
    %592 = vmatpush1.bf16.xpose.msra.mxu0 0
    %593 = vmatprep.subr.bf16.mxu0 0
    %594 = vmatpush1.bf16.xpose.msra.mxu0 0
    %595 = vmatprep.subr.bf16.mxu0 0
    %596 = vmatpush1.bf16.xpose.msra.mxu0 0
    %597 = vmatprep.subr.bf16.mxu0 0
    %598 = vmatpush1.bf16.xpose.msra.mxu0 0
    %599 = vmatprep.subr.bf16.mxu0 0
    %600 = vmatpush1.bf16.xpose.msra.mxu0 0
    %601 = vmatprep.subr.bf16.mxu0 0
    %602 = vmatpush1.bf16.xpose.msra.mxu0 0
    %603 = vmatprep.mubr.bf16.mxu0 0
    %604 = vmatmul.mubr.bf16.gmra.mrb[0].mxu0 %v566
    %v605 = vpop.f32.mrb[0].mxu0
    %v606 = vadd.f32 0.0, %v605
    %v607 = vpop.f32.mrb[0].mxu0
    %v608 = vpop.f32.mrb[0].mxu0
    %v609 = vpop.f32.mrb[0].mxu0
    %610 = vdwg.mxu0
    %v611 = vsel %vm242, %v284, -inf
    %612 = vmax.xlane.f32.xlu0 %v611
    %v613 = vpop.xlane.xlu0 %612
    %v614 = vsel %vm242, %v330, -inf
    %615 = vmax.xlane.f32.xlu0 %v614
    %v616 = vpop.xlane.xlu0 %615
    %v617 = vsel %vm242, %v376, -inf
    %618 = vmax.xlane.f32.xlu0 %v617
    %v619 = vpop.xlane.xlu0 %618
    %v620 = vsel %vm242, %v422, -inf
    %621 = vmax.xlane.f32.xlu0 %v620
    %v622 = vpop.xlane.xlu0 %621
    %v623 = vsel %vm242, %v468, -inf
    %624 = vmax.xlane.f32.xlu0 %v623
    %v625 = vpop.xlane.xlu0 %624
    %v626 = vsel %vm242, %v514, -inf
    %627 = vmax.xlane.f32.xlu0 %v626
    %v628 = vpop.xlane.xlu0 %627
    %v629 = vsel %vm242, %v560, -inf
    %630 = vmax.xlane.f32.xlu0 %v629
    %v631 = vpop.xlane.xlu0 %630
    %v632 = vsel %vm242, %v606, -inf
    %633 = vmax.xlane.f32.xlu0 %v632
    %v634 = vpop.xlane.xlu0 %633
    %v635 = vsub.f32 %v284, %v613
    %v636 = vsub.f32 %v330, %v616
    %v637 = vsub.f32 %v376, %v619
    %v638 = vsub.f32 %v422, %v622
    %v639 = vsub.f32 %v468, %v625
    %v640 = vsub.f32 %v514, %v628
    %v641 = vsub.f32 %v560, %v631
    %v642 = vsub.f32 %v606, %v634
    %v643 = vmul.f32 %v635, 1.442695
    %v644 = vpow.pop %v643
    %v645 = vmul.f32 %v636, 1.442695
    %v646 = vpow.pop %v645
    %v647 = vmul.f32 %v637, 1.442695
    %v648 = vpow.pop %v647
    %v649 = vmul.f32 %v638, 1.442695
    %v650 = vpow.pop %v649
    %v651 = vmul.f32 %v639, 1.442695
    %v652 = vpow.pop %v651
    %v653 = vmul.f32 %v640, 1.442695
    %v654 = vpow.pop %v653
    %v655 = vmul.f32 %v641, 1.442695
    %v656 = vpow.pop %v655
    %v657 = vmul.f32 %v642, 1.442695
    %v658 = vpow.pop %v657
    %v659 = vsel %vm242, %v644, 0.0
    %660 = vadd.xlane.f32.xlu0 %v659
    %v661 = vpop.xlane.xlu0 %660
    %v662 = vsel %vm242, %v646, 0.0
    %663 = vadd.xlane.f32.xlu0 %v662
    %v664 = vpop.xlane.xlu0 %663
    %v665 = vsel %vm242, %v648, 0.0
    %666 = vadd.xlane.f32.xlu0 %v665
    %v667 = vpop.xlane.xlu0 %666
    %v668 = vsel %vm242, %v650, 0.0
    %669 = vadd.xlane.f32.xlu0 %v668
    %v670 = vpop.xlane.xlu0 %669
    %v671 = vsel %vm242, %v652, 0.0
    %672 = vadd.xlane.f32.xlu0 %v671
    %v673 = vpop.xlane.xlu0 %672
    %v674 = vsel %vm242, %v654, 0.0
    %675 = vadd.xlane.f32.xlu0 %v674
    %v676 = vpop.xlane.xlu0 %675
    %v677 = vsel %vm242, %v656, 0.0
    %678 = vadd.xlane.f32.xlu0 %v677
    %v679 = vpop.xlane.xlu0 %678
    %v680 = vsel %vm242, %v658, 0.0
    %681 = vadd.xlane.f32.xlu0 %v680
    %v682 = vpop.xlane.xlu0 %681
    %v683 = vrcp.pop %v661
    %v684 = vrcp.pop %v664
    %v685 = vrcp.pop %v667
    %v686 = vrcp.pop %v670
    %v687 = vrcp.pop %v673
    %v688 = vrcp.pop %v676
    %v689 = vrcp.pop %v679
    %v690 = vrcp.pop %v682
    %v691 = vmul.f32 %v644, %v683
    %v692 = vmul.f32 %v646, %v684
    %v693 = vmul.f32 %v648, %v685
    %v694 = vmul.f32 %v650, %v686
    %v695 = vmul.f32 %v652, %v687
    %v696 = vmul.f32 %v654, %v688
    %v697 = vmul.f32 %v656, %v689
    %v698 = vmul.f32 %v658, %v690
    %v699 = vpack.c.bf16 %v691, %v691
    %v700 = vpack.c.bf16 %v692, %v692
    %v701 = vpack.c.bf16 %v693, %v693
    %v702 = vpack.c.bf16 %v694, %v694
    %v703 = vpack.c.bf16 %v695, %v695
    %v704 = vpack.c.bf16 %v696, %v696
    %v705 = vpack.c.bf16 %v697, %v697
    %v706 = vpack.c.bf16 %v698, %v698
    %v708 = vsel %vm242, %v699, 0
    %vm710 = vcmask 1043456
    %v712 = vsel %vm710, %v234, 0
    %714 = vmatprep.subr.bf16.mxu0 0
    %715 = vmatpush1.bf16.msra.mxu0 %v712
    %716 = vmatprep.subr.bf16.mxu0 0
    %717 = vmatpush1.bf16.msra.mxu0 0
    %718 = vmatprep.subr.bf16.mxu0 0
    %719 = vmatpush1.bf16.msra.mxu0 0
    %720 = vmatprep.subr.bf16.mxu0 0
    %721 = vmatpush1.bf16.msra.mxu0 0
    %722 = vmatprep.subr.bf16.mxu0 0
    %723 = vmatpush1.bf16.msra.mxu0 0
    %724 = vmatprep.subr.bf16.mxu0 0
    %725 = vmatpush1.bf16.msra.mxu0 0
    %726 = vmatprep.subr.bf16.mxu0 0
    %727 = vmatpush1.bf16.msra.mxu0 0
    %728 = vmatprep.subr.bf16.mxu0 0
    %729 = vmatpush1.bf16.msra.mxu0 0
    %730 = vmatprep.subr.bf16.mxu0 0
    %731 = vmatpush1.bf16.msra.mxu0 0
    %732 = vmatprep.subr.bf16.mxu0 0
    %733 = vmatpush1.bf16.msra.mxu0 0
    %734 = vmatprep.subr.bf16.mxu0 0
    %735 = vmatpush1.bf16.msra.mxu0 0
    %736 = vmatprep.subr.bf16.mxu0 0
    %737 = vmatpush1.bf16.msra.mxu0 0
    %738 = vmatprep.subr.bf16.mxu0 0
    %739 = vmatpush1.bf16.msra.mxu0 0
    %740 = vmatprep.subr.bf16.mxu0 0
    %741 = vmatpush1.bf16.msra.mxu0 0
    %742 = vmatprep.subr.bf16.mxu0 0
    %743 = vmatpush1.bf16.msra.mxu0 0
    %744 = vmatprep.subr.bf16.mxu0 0
    %745 = vmatpush1.bf16.msra.mxu0 0
    %746 = vmatprep.mubr.bf16.mxu0 0
    %747 = vmatmul.mubr.bf16.gmra.mrb[0].mxu0 %v708
    %v748 = vpop.f32.mrb[0].mxu0
    %v749 = vadd.f32 0.0, %v748
    %v750 = vpop.f32.mrb[0].mxu0
    %v751 = vpop.f32.mrb[0].mxu0
    %v752 = vpop.f32.mrb[0].mxu0
    %753 = vdwg.mxu0
    %v755 = vsel %vm242, %v700, 0
    %v758 = vsel %vm710, %v235, 0
    %760 = vmatprep.subr.bf16.mxu0 0
    %761 = vmatpush1.bf16.msra.mxu0 %v758
    %762 = vmatprep.subr.bf16.mxu0 0
    %763 = vmatpush1.bf16.msra.mxu0 0
    %764 = vmatprep.subr.bf16.mxu0 0
    %765 = vmatpush1.bf16.msra.mxu0 0
    %766 = vmatprep.subr.bf16.mxu0 0
    %767 = vmatpush1.bf16.msra.mxu0 0
    %768 = vmatprep.subr.bf16.mxu0 0
    %769 = vmatpush1.bf16.msra.mxu0 0
    %770 = vmatprep.subr.bf16.mxu0 0
    %771 = vmatpush1.bf16.msra.mxu0 0
    %772 = vmatprep.subr.bf16.mxu0 0
    %773 = vmatpush1.bf16.msra.mxu0 0
    %774 = vmatprep.subr.bf16.mxu0 0
    %775 = vmatpush1.bf16.msra.mxu0 0
    %776 = vmatprep.subr.bf16.mxu0 0
    %777 = vmatpush1.bf16.msra.mxu0 0
    %778 = vmatprep.subr.bf16.mxu0 0
    %779 = vmatpush1.bf16.msra.mxu0 0
    %780 = vmatprep.subr.bf16.mxu0 0
    %781 = vmatpush1.bf16.msra.mxu0 0
    %782 = vmatprep.subr.bf16.mxu0 0
    %783 = vmatpush1.bf16.msra.mxu0 0
    %784 = vmatprep.subr.bf16.mxu0 0
    %785 = vmatpush1.bf16.msra.mxu0 0
    %786 = vmatprep.subr.bf16.mxu0 0
    %787 = vmatpush1.bf16.msra.mxu0 0
    %788 = vmatprep.subr.bf16.mxu0 0
    %789 = vmatpush1.bf16.msra.mxu0 0
    %790 = vmatprep.subr.bf16.mxu0 0
    %791 = vmatpush1.bf16.msra.mxu0 0
    %792 = vmatprep.mubr.bf16.mxu0 0
    %793 = vmatmul.mubr.bf16.gmra.mrb[0].mxu0 %v755
    %v794 = vpop.f32.mrb[0].mxu0
    %v795 = vadd.f32 0.0, %v794
    %v796 = vpop.f32.mrb[0].mxu0
    %v797 = vpop.f32.mrb[0].mxu0
    %v798 = vpop.f32.mrb[0].mxu0
    %799 = vdwg.mxu0
    %v801 = vsel %vm242, %v701, 0
    %v804 = vsel %vm710, %v236, 0
    %806 = vmatprep.subr.bf16.mxu0 0
    %807 = vmatpush1.bf16.msra.mxu0 %v804
    %808 = vmatprep.subr.bf16.mxu0 0
    %809 = vmatpush1.bf16.msra.mxu0 0
    %810 = vmatprep.subr.bf16.mxu0 0
    %811 = vmatpush1.bf16.msra.mxu0 0
    %812 = vmatprep.subr.bf16.mxu0 0
    %813 = vmatpush1.bf16.msra.mxu0 0
    %814 = vmatprep.subr.bf16.mxu0 0
    %815 = vmatpush1.bf16.msra.mxu0 0
    %816 = vmatprep.subr.bf16.mxu0 0
    %817 = vmatpush1.bf16.msra.mxu0 0
    %818 = vmatprep.subr.bf16.mxu0 0
    %819 = vmatpush1.bf16.msra.mxu0 0
    %820 = vmatprep.subr.bf16.mxu0 0
    %821 = vmatpush1.bf16.msra.mxu0 0
    %822 = vmatprep.subr.bf16.mxu0 0
    %823 = vmatpush1.bf16.msra.mxu0 0
    %824 = vmatprep.subr.bf16.mxu0 0
    %825 = vmatpush1.bf16.msra.mxu0 0
    %826 = vmatprep.subr.bf16.mxu0 0
    %827 = vmatpush1.bf16.msra.mxu0 0
    %828 = vmatprep.subr.bf16.mxu0 0
    %829 = vmatpush1.bf16.msra.mxu0 0
    %830 = vmatprep.subr.bf16.mxu0 0
    %831 = vmatpush1.bf16.msra.mxu0 0
    %832 = vmatprep.subr.bf16.mxu0 0
    %833 = vmatpush1.bf16.msra.mxu0 0
    %834 = vmatprep.subr.bf16.mxu0 0
    %835 = vmatpush1.bf16.msra.mxu0 0
    %836 = vmatprep.subr.bf16.mxu0 0
    %837 = vmatpush1.bf16.msra.mxu0 0
    %838 = vmatprep.mubr.bf16.mxu0 0
    %839 = vmatmul.mubr.bf16.gmra.mrb[0].mxu0 %v801
    %v840 = vpop.f32.mrb[0].mxu0
    %v841 = vadd.f32 0.0, %v840
    %v842 = vpop.f32.mrb[0].mxu0
    %v843 = vpop.f32.mrb[0].mxu0
    %v844 = vpop.f32.mrb[0].mxu0
    %845 = vdwg.mxu0
    %v847 = vsel %vm242, %v702, 0
    %v850 = vsel %vm710, %v237, 0
    %852 = vmatprep.subr.bf16.mxu0 0
    %853 = vmatpush1.bf16.msra.mxu0 %v850
    %854 = vmatprep.subr.bf16.mxu0 0
    %855 = vmatpush1.bf16.msra.mxu0 0
    %856 = vmatprep.subr.bf16.mxu0 0
    %857 = vmatpush1.bf16.msra.mxu0 0
    %858 = vmatprep.subr.bf16.mxu0 0
    %859 = vmatpush1.bf16.msra.mxu0 0
    %860 = vmatprep.subr.bf16.mxu0 0
    %861 = vmatpush1.bf16.msra.mxu0 0
    %862 = vmatprep.subr.bf16.mxu0 0
    %863 = vmatpush1.bf16.msra.mxu0 0
    %864 = vmatprep.subr.bf16.mxu0 0
    %865 = vmatpush1.bf16.msra.mxu0 0
    %866 = vmatprep.subr.bf16.mxu0 0
    %867 = vmatpush1.bf16.msra.mxu0 0
    %868 = vmatprep.subr.bf16.mxu0 0
    %869 = vmatpush1.bf16.msra.mxu0 0
    %870 = vmatprep.subr.bf16.mxu0 0
    %871 = vmatpush1.bf16.msra.mxu0 0
    %872 = vmatprep.subr.bf16.mxu0 0
    %873 = vmatpush1.bf16.msra.mxu0 0
    %874 = vmatprep.subr.bf16.mxu0 0
    %875 = vmatpush1.bf16.msra.mxu0 0
    %876 = vmatprep.subr.bf16.mxu0 0
    %877 = vmatpush1.bf16.msra.mxu0 0
    %878 = vmatprep.subr.bf16.mxu0 0
    %879 = vmatpush1.bf16.msra.mxu0 0
    %880 = vmatprep.subr.bf16.mxu0 0
    %881 = vmatpush1.bf16.msra.mxu0 0
    %882 = vmatprep.subr.bf16.mxu0 0
    %883 = vmatpush1.bf16.msra.mxu0 0
    %884 = vmatprep.mubr.bf16.mxu0 0
    %885 = vmatmul.mubr.bf16.gmra.mrb[0].mxu0 %v847
    %v886 = vpop.f32.mrb[0].mxu0
    %v887 = vadd.f32 0.0, %v886
    %v888 = vpop.f32.mrb[0].mxu0
    %v889 = vpop.f32.mrb[0].mxu0
    %v890 = vpop.f32.mrb[0].mxu0
    %891 = vdwg.mxu0
    %v893 = vsel %vm242, %v703, 0
    %v896 = vsel %vm710, %v238, 0
    %898 = vmatprep.subr.bf16.mxu0 0
    %899 = vmatpush1.bf16.msra.mxu0 %v896
    %900 = vmatprep.subr.bf16.mxu0 0
    %901 = vmatpush1.bf16.msra.mxu0 0
    %902 = vmatprep.subr.bf16.mxu0 0
    %903 = vmatpush1.bf16.msra.mxu0 0
    %904 = vmatprep.subr.bf16.mxu0 0
    %905 = vmatpush1.bf16.msra.mxu0 0
    %906 = vmatprep.subr.bf16.mxu0 0
    %907 = vmatpush1.bf16.msra.mxu0 0
    %908 = vmatprep.subr.bf16.mxu0 0
    %909 = vmatpush1.bf16.msra.mxu0 0
    %910 = vmatprep.subr.bf16.mxu0 0
    %911 = vmatpush1.bf16.msra.mxu0 0
    %912 = vmatprep.subr.bf16.mxu0 0
    %913 = vmatpush1.bf16.msra.mxu0 0
    %914 = vmatprep.subr.bf16.mxu0 0
    %915 = vmatpush1.bf16.msra.mxu0 0
    %916 = vmatprep.subr.bf16.mxu0 0
    %917 = vmatpush1.bf16.msra.mxu0 0
    %918 = vmatprep.subr.bf16.mxu0 0
    %919 = vmatpush1.bf16.msra.mxu0 0
    %920 = vmatprep.subr.bf16.mxu0 0
    %921 = vmatpush1.bf16.msra.mxu0 0
    %922 = vmatprep.subr.bf16.mxu0 0
    %923 = vmatpush1.bf16.msra.mxu0 0
    %924 = vmatprep.subr.bf16.mxu0 0
    %925 = vmatpush1.bf16.msra.mxu0 0
    %926 = vmatprep.subr.bf16.mxu0 0
    %927 = vmatpush1.bf16.msra.mxu0 0
    %928 = vmatprep.subr.bf16.mxu0 0
    %929 = vmatpush1.bf16.msra.mxu0 0
    %930 = vmatprep.mubr.bf16.mxu0 0
    %931 = vmatmul.mubr.bf16.gmra.mrb[0].mxu0 %v893
    %v932 = vpop.f32.mrb[0].mxu0
    %v933 = vadd.f32 0.0, %v932
    %v934 = vpop.f32.mrb[0].mxu0
    %v935 = vpop.f32.mrb[0].mxu0
    %v936 = vpop.f32.mrb[0].mxu0
    %937 = vdwg.mxu0
    %v939 = vsel %vm242, %v704, 0
    %v942 = vsel %vm710, %v239, 0
    %944 = vmatprep.subr.bf16.mxu0 0
    %945 = vmatpush1.bf16.msra.mxu0 %v942
    %946 = vmatprep.subr.bf16.mxu0 0
    %947 = vmatpush1.bf16.msra.mxu0 0
    %948 = vmatprep.subr.bf16.mxu0 0
    %949 = vmatpush1.bf16.msra.mxu0 0
    %950 = vmatprep.subr.bf16.mxu0 0
    %951 = vmatpush1.bf16.msra.mxu0 0
    %952 = vmatprep.subr.bf16.mxu0 0
    %953 = vmatpush1.bf16.msra.mxu0 0
    %954 = vmatprep.subr.bf16.mxu0 0
    %955 = vmatpush1.bf16.msra.mxu0 0
    %956 = vmatprep.subr.bf16.mxu0 0
    %957 = vmatpush1.bf16.msra.mxu0 0
    %958 = vmatprep.subr.bf16.mxu0 0
    %959 = vmatpush1.bf16.msra.mxu0 0
    %960 = vmatprep.subr.bf16.mxu0 0
    %961 = vmatpush1.bf16.msra.mxu0 0
    %962 = vmatprep.subr.bf16.mxu0 0
    %963 = vmatpush1.bf16.msra.mxu0 0
    %964 = vmatprep.subr.bf16.mxu0 0
    %965 = vmatpush1.bf16.msra.mxu0 0
    %966 = vmatprep.subr.bf16.mxu0 0
    %967 = vmatpush1.bf16.msra.mxu0 0
    %968 = vmatprep.subr.bf16.mxu0 0
    %969 = vmatpush1.bf16.msra.mxu0 0
    %970 = vmatprep.subr.bf16.mxu0 0
    %971 = vmatpush1.bf16.msra.mxu0 0
    %972 = vmatprep.subr.bf16.mxu0 0
    %973 = vmatpush1.bf16.msra.mxu0 0
    %974 = vmatprep.subr.bf16.mxu0 0
    %975 = vmatpush1.bf16.msra.mxu0 0
    %976 = vmatprep.mubr.bf16.mxu0 0
    %977 = vmatmul.mubr.bf16.gmra.mrb[0].mxu0 %v939
    %v978 = vpop.f32.mrb[0].mxu0
    %v979 = vadd.f32 0.0, %v978
    %v980 = vpop.f32.mrb[0].mxu0
    %v981 = vpop.f32.mrb[0].mxu0
    %v982 = vpop.f32.mrb[0].mxu0
    %983 = vdwg.mxu0
    %v985 = vsel %vm242, %v705, 0
    %v988 = vsel %vm710, %v240, 0
    %990 = vmatprep.subr.bf16.mxu0 0
    %991 = vmatpush1.bf16.msra.mxu0 %v988
    %992 = vmatprep.subr.bf16.mxu0 0
    %993 = vmatpush1.bf16.msra.mxu0 0
    %994 = vmatprep.subr.bf16.mxu0 0
    %995 = vmatpush1.bf16.msra.mxu0 0
    %996 = vmatprep.subr.bf16.mxu0 0
    %997 = vmatpush1.bf16.msra.mxu0 0
    %998 = vmatprep.subr.bf16.mxu0 0
    %999 = vmatpush1.bf16.msra.mxu0 0
    %1000 = vmatprep.subr.bf16.mxu0 0
    %1001 = vmatpush1.bf16.msra.mxu0 0
    %1002 = vmatprep.subr.bf16.mxu0 0
    %1003 = vmatpush1.bf16.msra.mxu0 0
    %1004 = vmatprep.subr.bf16.mxu0 0
    %1005 = vmatpush1.bf16.msra.mxu0 0
    %1006 = vmatprep.subr.bf16.mxu0 0
    %1007 = vmatpush1.bf16.msra.mxu0 0
    %1008 = vmatprep.subr.bf16.mxu0 0
    %1009 = vmatpush1.bf16.msra.mxu0 0
    %1010 = vmatprep.subr.bf16.mxu0 0
    %1011 = vmatpush1.bf16.msra.mxu0 0
    %1012 = vmatprep.subr.bf16.mxu0 0
    %1013 = vmatpush1.bf16.msra.mxu0 0
    %1014 = vmatprep.subr.bf16.mxu0 0
    %1015 = vmatpush1.bf16.msra.mxu0 0
    %1016 = vmatprep.subr.bf16.mxu0 0
    %1017 = vmatpush1.bf16.msra.mxu0 0
    %1018 = vmatprep.subr.bf16.mxu0 0
    %1019 = vmatpush1.bf16.msra.mxu0 0
    %1020 = vmatprep.subr.bf16.mxu0 0
    %1021 = vmatpush1.bf16.msra.mxu0 0
    %1022 = vmatprep.mubr.bf16.mxu0 0
    %1023 = vmatmul.mubr.bf16.gmra.mrb[0].mxu0 %v985
    %v1024 = vpop.f32.mrb[0].mxu0
    %v1025 = vadd.f32 0.0, %v1024
    %v1026 = vpop.f32.mrb[0].mxu0
    %v1027 = vpop.f32.mrb[0].mxu0
    %v1028 = vpop.f32.mrb[0].mxu0
    %1029 = vdwg.mxu0
    %v1031 = vsel %vm242, %v706, 0
    %v1034 = vsel %vm710, %v241, 0
    %1036 = vmatprep.subr.bf16.mxu0 0
    %1037 = vmatpush1.bf16.msra.mxu0 %v1034
    %1038 = vmatprep.subr.bf16.mxu0 0
    %1039 = vmatpush1.bf16.msra.mxu0 0
    %1040 = vmatprep.subr.bf16.mxu0 0
    %1041 = vmatpush1.bf16.msra.mxu0 0
    %1042 = vmatprep.subr.bf16.mxu0 0
    %1043 = vmatpush1.bf16.msra.mxu0 0
    %1044 = vmatprep.subr.bf16.mxu0 0
    %1045 = vmatpush1.bf16.msra.mxu0 0
    %1046 = vmatprep.subr.bf16.mxu0 0
    %1047 = vmatpush1.bf16.msra.mxu0 0
    %1048 = vmatprep.subr.bf16.mxu0 0
    %1049 = vmatpush1.bf16.msra.mxu0 0
    %1050 = vmatprep.subr.bf16.mxu0 0
    %1051 = vmatpush1.bf16.msra.mxu0 0
    %1052 = vmatprep.subr.bf16.mxu0 0
    %1053 = vmatpush1.bf16.msra.mxu0 0
    %1054 = vmatprep.subr.bf16.mxu0 0
    %1055 = vmatpush1.bf16.msra.mxu0 0
    %1056 = vmatprep.subr.bf16.mxu0 0
    %1057 = vmatpush1.bf16.msra.mxu0 0
    %1058 = vmatprep.subr.bf16.mxu0 0
    %1059 = vmatpush1.bf16.msra.mxu0 0
    %1060 = vmatprep.subr.bf16.mxu0 0
    %1061 = vmatpush1.bf16.msra.mxu0 0
    %1062 = vmatprep.subr.bf16.mxu0 0
    %1063 = vmatpush1.bf16.msra.mxu0 0
    %1064 = vmatprep.subr.bf16.mxu0 0
    %1065 = vmatpush1.bf16.msra.mxu0 0
    %1066 = vmatprep.subr.bf16.mxu0 0
    %1067 = vmatpush1.bf16.msra.mxu0 0
    %1068 = vmatprep.mubr.bf16.mxu0 0
    %1069 = vmatmul.mubr.bf16.gmra.mrb[0].mxu0 %v1031
    %v1070 = vpop.f32.mrb[0].mxu0
    %v1071 = vadd.f32 0.0, %v1070
    %v1072 = vpop.f32.mrb[0].mxu0
    %v1073 = vpop.f32.mrb[0].mxu0
    %v1074 = vpop.f32.mrb[0].mxu0
    %1075 = vdwg.mxu0
    %v1076 = vpack.c.bf16 %v749, %v749
    %1077 = vst.msk [vmem:[#allocation3] sm:$0xf] %vm98, %v1076
    %v1078 = vpack.c.bf16 %v795, %v795
    %1080 = vrot.lane.b32.xlu0 %v1078, 8
    %v1081 = vpop.permute.xlu0 %1080
    %vm1083 = vcmask 126016
    %1084 = vst.msk [vmem:[#allocation3] sm:$0xf] %vm1083, %v1081
    %v1085 = vpack.c.bf16 %v841, %v841
    %1087 = vrot.lane.b32.xlu0 %v1085, 16
    %v1088 = vpop.permute.xlu0 %1087
    %vm1090 = vcmask 191616
    %1091 = vst.msk [vmem:[#allocation3] sm:$0xf] %vm1090, %v1088
    %v1092 = vpack.c.bf16 %v887, %v887
    %1094 = vrot.lane.b32.xlu0 %v1092, 24
    %v1095 = vpop.permute.xlu0 %1094
    %vm1097 = vcmask 257216
    %1098 = vst.msk [vmem:[#allocation3] sm:$0xf] %vm1097, %v1095
    %v1099 = vpack.c.bf16 %v933, %v933
    %v1101 = vrot.slane %v1099, 4
    %vm1103 = vcmask 64516
    %1104 = vst.msk [vmem:[#allocation3] sm:$0xf0] %vm1103, %v1101
    %v1105 = vpack.c.bf16 %v979, %v979
    %v1107 = vrot.slane %v1105, 4
    %1108 = vrot.lane.b32.xlu0 %v1107, 8
    %v1109 = vpop.permute.xlu0 %1108
    %vm1111 = vcmask 130116
    %1112 = vst.msk [vmem:[#allocation3] sm:$0xf0] %vm1111, %v1109
    %v1113 = vpack.c.bf16 %v1025, %v1025
    %v1115 = vrot.slane %v1113, 4
    %1116 = vrot.lane.b32.xlu0 %v1115, 16
    %v1117 = vpop.permute.xlu0 %1116
    %vm1119 = vcmask 195716
    %1120 = vst.msk [vmem:[#allocation3] sm:$0xf0] %vm1119, %v1117
    %v1121 = vpack.c.bf16 %v1071, %v1071
    %v1123 = vrot.slane %v1121, 4
    %1124 = vrot.lane.b32.xlu0 %v1123, 24
    %v1125 = vpop.permute.xlu0 %1124
    %vm1127 = vcmask 261316
    %1128 = vst.msk [vmem:[#allocation3] sm:$0xf0] %vm1127, %v1125
    %v1129 = vld [vmem:[#allocation3] sm:$0xff]
    %v1130 = vld [vmem:[%s3] sm:$0xf]
    %v1131 = vld [vmem:[%s3 + $0x4] sm:$0xf]
    %v1132 = vld [vmem:[%s3 + $0x8] sm:$0xf]
    %v1133 = vld [vmem:[%s3 + $0xc] sm:$0xf]
    %v1134 = vld [vmem:[%s4] sm:$0x1]
    %v1136 = vlaneseq
    %v1137 = vshrl.u32 %v1136, 7
    %v1138 = vsub.s32 0, %v1137
    %v1139 = vrot.slane %v1134, %v1138
    %v1145 = vunpack.c.l.b16 %v1130
    %v1146 = vunpack.c.l.b16 %v1131
    %v1147 = vunpack.c.l.b16 %v1132
    %v1148 = vunpack.c.l.b16 %v1133
    %v1149 = vpack.c.b16 %v1146, %v1145
    %v1150 = vpack.c.b16 %v1148, %v1147
    %v1154 = vsel %vm52, %v1129, 0
    %1156 = vmatprep.subr.bf16.mxu0 0
    %1157 = vmatpush1.bf16.msra.mxu0 %v1149
    %1158 = vmatprep.subr.bf16.mxu0 0
    %1159 = vmatpush1.bf16.msra.mxu0 %v1150
    %1160 = vmatprep.subr.bf16.mxu0 0
    %1161 = vmatpush1.bf16.msra.mxu0 0
    %1162 = vmatprep.subr.bf16.mxu0 0
    %1163 = vmatpush1.bf16.msra.mxu0 0
    %1164 = vmatprep.subr.bf16.mxu0 0
    %1165 = vmatpush1.bf16.msra.mxu0 0
    %1166 = vmatprep.subr.bf16.mxu0 0
    %1167 = vmatpush1.bf16.msra.mxu0 0
    %1168 = vmatprep.subr.bf16.mxu0 0
    %1169 = vmatpush1.bf16.msra.mxu0 0
    %1170 = vmatprep.subr.bf16.mxu0 0
    %1171 = vmatpush1.bf16.msra.mxu0 0
    %1172 = vmatprep.subr.bf16.mxu0 0
    %1173 = vmatpush1.bf16.msra.mxu0 0
    %1174 = vmatprep.subr.bf16.mxu0 0
    %1175 = vmatpush1.bf16.msra.mxu0 0
    %1176 = vmatprep.subr.bf16.mxu0 0
    %1177 = vmatpush1.bf16.msra.mxu0 0
    %1178 = vmatprep.subr.bf16.mxu0 0
    %1179 = vmatpush1.bf16.msra.mxu0 0
    %1180 = vmatprep.subr.bf16.mxu0 0
    %1181 = vmatpush1.bf16.msra.mxu0 0
    %1182 = vmatprep.subr.bf16.mxu0 0
    %1183 = vmatpush1.bf16.msra.mxu0 0
    %1184 = vmatprep.subr.bf16.mxu0 0
    %1185 = vmatpush1.bf16.msra.mxu0 0
    %1186 = vmatprep.subr.bf16.mxu0 0
    %1187 = vmatpush1.bf16.msra.mxu0 0
    %1188 = vmatprep.mubr.bf16.mxu0 0
    %1189 = vmatmul.mubr.bf16.gmra.mrb[0].mxu0 %v1154
    %v1190 = vpop.f32.mrb[0].mxu0
    %v1191 = vadd.f32 %v1139, %v1190
    %v1192 = vpop.f32.mrb[0].mxu0
    %v1193 = vpop.f32.mrb[0].mxu0
    %v1194 = vadd.f32 %v1139, %v1193
    %v1195 = vpop.f32.mrb[0].mxu0
    %1196 = vdwg.mxu0
    %1197 = vst.msk [vmem:[#allocation4] sm:$0xff] %vm52, %v1191
    %1198 = vst.msk [vmem:[#allocation4 + $0x8] sm:$0xff] %vm52, %v1194
    // Predicated region
    $region22: #{multihead_attention.1} parent=1 // pred_check
      _
    $region23: #{multihead_attention.1} parent=1 // pred_check_branch
      %1200 = sbr.rel (0) target = $region25
    $region24: #{multihead_attention.1} parent=1 // pred_region
      %s1202 = ssub.s32 256, 256
      %1203 = vsyncadd [#allocation5], %s1202
      %s1204 = sshll.u32 [#allocation4], 4
      %s1205 = int_to_ptr.vmem [resolvable:$true] %s1204
      %1210 = dma.vmem_to_hbm [thread:$0]  %s1205, 256, %s5, [#allocation5], 128, 128, 8
    $region25: #{multihead_attention.1} parent=1 // pred_fallthru
      _
    // Predicated region
    $region26: #{multihead_attention.1} parent=1 // pred_check
      _
    $region27: #{multihead_attention.1} parent=1 // pred_check_branch
      %1212 = sbr.rel (0) target = $region29
    $region28: #{multihead_attention.1} parent=1 // pred_region
      %1213 = dma.done [#allocation5], 256
    $region29: #{multihead_attention.1} parent=1 // pred_fallthru
      _
    %1214 = vsyncpa [#allocation5], 1

</llo_original>
